<compile_context>
chip_gen: v7x
topology: tpu7x:2x2x1
jax: 0.10.0
libtpu: 0.0.40
codegen_flags: <defaults>
</compile_context>

<pallas_src>
import functools

import jax
import jax.numpy as jnp
from jax.experimental import pallas as pl
from jax.experimental.pallas import tpu as pltpu

_LANE = 128
_VMEM_LIMIT = 32 * 1024 * 1024   # valid on v5e/v6e/v7x; raise for larger tiles on v6e.


def _round_up(x, m):
    return (x + m - 1) // m * m


def _pick_tile_h(h, w):
    """Largest divisor of H whose tile has <= ~1024 output rows (th * W)."""
    best = 1
    for t in range(1, h + 1):
        if h % t == 0 and t * w <= 1024:
            best = t
    return best


def _conv_bias_stats_kernel(x_ref, w_ref, b_ref, y_ref, stats_ref):
    """3x3 conv (stride 1, reflect pad) + bias + per-tile BN partial stats.

    x_ref:     (1, H, W+2, Cin)      bf16  whole width-reflect-padded image (resident per n)
    w_ref:     (9, Cin, Cout_pad)    bf16  full 3x3 weight bank, resident across the grid
    b_ref:     (1, Cout_pad)         f32
    y_ref:     (1, th, W, Cout_pad)  f32   conv+bias tile (pre-BN)
    stats_ref: (1, 1, 2, Cout_pad)   f32   [sum, sum_of_squares] over this tile's rows
    """
    _, h, _, cin = x_ref.shape
    _, th, w, cout_pad = y_ref.shape

    hi = pl.program_id(1)
    nh = pl.num_programs(1)
    row0 = hi * th
    # ReflectionPad2d(1) along H folded into the halo load (mirror, not clamp):
    #   padded row -1 -> row 1, padded row H -> row H-2.
    top = jnp.where(hi == 0, 1, row0 - 1)
    bot = jnp.where(hi == nh - 1, h - 2, row0 + th)
    halo = jnp.concatenate(
        [x_ref[0, pl.ds(top, 1)],       # (1,  W+2, Cin)
         x_ref[0, pl.ds(row0, th)],     # (th, W+2, Cin)
         x_ref[0, pl.ds(bot, 1)]],      # (1,  W+2, Cin)
        axis=0)                         # (th+2, W+2, Cin)

    acc = jnp.zeros((th * w, cout_pad), jnp.float32)
    for dy in range(3):
        for dx in range(3):
            patch = halo[dy:dy + th, dx:dx + w, :].reshape(th * w, cin)
            acc = acc + jnp.dot(patch, w_ref[3 * dy + dx],
                                preferred_element_type=jnp.float32)
    y = acc + b_ref[...]                                    # (th*W, Cout_pad) f32

    stats_ref[0, 0, 0:1, :] = jnp.sum(y, axis=0, keepdims=True)
    stats_ref[0, 0, 1:2, :] = jnp.sum(y * y, axis=0, keepdims=True)
    y_ref[0] = y.reshape(th, w, cout_pad)


def _bn_lrelu_kernel(y_ref, scale_ref, shift_ref, o_ref, *, alpha):
    """Fused BatchNorm (precomputed per-channel scale/shift) + LeakyReLU epilogue."""
    z = y_ref[0] * scale_ref[...] + shift_ref[...]
    o_ref[0] = jnp.where(z >= 0, z, alpha * z)


def conv2d_layer2(x, weight, bias, *, alpha_relu=0.15, eps=1e-5, tile_h=None):
    """Forward pass of Conv2DLayer2 (default config) using Pallas TPU kernels.

    x:      (N, Cin, H, W) float32 (NCHW, PyTorch layout)
    weight: (Cout, Cin, 3, 3) float32
    bias:   (Cout,) float32
    returns (N, Cout, H, W) float32
    """
    n, cin, h, w = x.shape
    cout = weight.shape[0]
    if weight.shape != (cout, cin, 3, 3):
        raise ValueError("expected a 3x3 conv weight")
    if h < 2 or w < 2:
        raise ValueError("ReflectionPad2d(1) needs H >= 2 and W >= 2")

    th = tile_h if tile_h is not None else _pick_tile_h(h, w)
    if h % th != 0:
        raise ValueError(f"tile_h={th} must divide H={h}")
    nh = h // th
    cout_pad = _round_up(cout, _LANE)

    # Single fused layout pass over the (small) input: NCHW -> NHWC, bf16 cast, and the
    # W-axis reflection pad.  No separate padded-activation round trip through HBM.
    x_nhwc = jnp.transpose(x, (0, 2, 3, 1))
    x_prep = jnp.concatenate(
        [x_nhwc[:, :, 1:2, :], x_nhwc, x_nhwc[:, :, w - 2:w - 1, :]], axis=2
    ).astype(jnp.bfloat16)                                   # (N, H, W+2, Cin)

    # Weights as a (9, Cin, Cout_pad) tap bank; lane dim = (padded) output channels.
    w_taps = jnp.transpose(weight, (2, 3, 1, 0)).reshape(9, cin, cout)
    w_taps = jnp.pad(w_taps, ((0, 0), (0, 0), (0, cout_pad - cout))).astype(jnp.bfloat16)
    b_prep = jnp.pad(bias.astype(jnp.float32), (0, cout_pad - cout)).reshape(1, cout_pad)

    grid = (n, nh)
    cparams = pltpu.CompilerParams(
        dimension_semantics=("parallel", "parallel"),
        vmem_limit_bytes=_VMEM_LIMIT)

    # Pass 1: conv + bias + BN partial stats (one write of the raw activation).
    y_raw, stats = pl.pallas_call(
        _conv_bias_stats_kernel,
        grid=grid,
        in_specs=[
            pl.BlockSpec((1, h, w + 2, cin), lambda i, j: (i, 0, 0, 0)),
            pl.BlockSpec((9, cin, cout_pad), lambda i, j: (0, 0, 0)),
            pl.BlockSpec((1, cout_pad), lambda i, j: (0, 0)),
        ],
        out_specs=[
            pl.BlockSpec((1, th, w, cout_pad), lambda i, j: (i, j, 0, 0)),
            pl.BlockSpec((1, 1, 2, cout_pad), lambda i, j: (i, j, 0, 0)),
        ],
        out_shape=(
            jax.ShapeDtypeStruct((n, h, w, cout_pad), jnp.float32),
            jax.ShapeDtypeStruct((n, nh, 2, cout_pad), jnp.float32),
        ),
        compiler_params=cparams,
    )(x_prep, w_taps, b_prep)

    # Tiny reduction of the per-tile partials -> BN scale/shift
    # (training-mode batch stats, biased variance, gamma=1, beta=0).
    tot = jnp.sum(stats, axis=(0, 1))                        # (2, Cout_pad)
    cnt = jnp.asarray(n * h * w, jnp.float32)
    mean = tot[0] / cnt
    var = jnp.maximum(tot[1] / cnt - mean * mean, 0.0)
    inv_std = jax.lax.rsqrt(var + eps)
    scale = inv_std.reshape(1, cout_pad)
    shift = (-mean * inv_std).reshape(1, cout_pad)

    # Pass 2: fused BN + LeakyReLU over lane-dense (Cout_pad) tiles.
    out_pad = pl.pallas_call(
        functools.partial(_bn_lrelu_kernel, alpha=alpha_relu),
        grid=grid,
        in_specs=[
            pl.BlockSpec((1, th, w, cout_pad), lambda i, j: (i, j, 0, 0)),
            pl.BlockSpec((1, cout_pad), lambda i, j: (0, 0)),
            pl.BlockSpec((1, cout_pad), lambda i, j: (0, 0)),
        ],
        out_specs=pl.BlockSpec((1, th, w, cout_pad), lambda i, j: (i, j, 0, 0)),
        out_shape=jax.ShapeDtypeStruct((n, h, w, cout_pad), jnp.float32),
        compiler_params=cparams,
    )(y_raw, scale, shift)

    # Back to the PyTorch NCHW contract.  In a fused network the consumer would take the
    # NHWC result directly ("transpose lazily in the consumer"); here it is one fused
    # slice+transpose XLA copy, not an extra kernel-side pass.
    return jnp.transpose(out_pad[..., :cout], (0, 3, 1, 2))


def _reference(x, weight, bias, *, alpha_relu=0.15, eps=1e-5):
    """Pure-JAX reference with matched operand precision (bf16 conv operands)."""
    xr = x.astype(jnp.bfloat16).astype(jnp.float32)
    wr = weight.astype(jnp.bfloat16).astype(jnp.float32)
    xp = jnp.pad(xr, ((0, 0), (0, 0), (1, 1), (1, 1)), mode="reflect")
    y = jax.lax.conv_general_dilated(
        xp, wr, window_strides=(1, 1), padding="VALID",
        dimension_numbers=("NCHW", "OIHW", "NCHW"))
    y = y + bias.reshape(1, -1, 1, 1)
    mean = jnp.mean(y, axis=(0, 2, 3), keepdims=True)
    var = jnp.mean(jnp.square(y - mean), axis=(0, 2, 3), keepdims=True)  # biased
    z = (y - mean) * jax.lax.rsqrt(var + eps)
    return jnp.where(z >= 0, z, alpha_relu * z)


# TODO(synk): only the module's default configuration is implemented (scale='none',
# use_pad=True, use_bias=True, norm_type='bn' with training-mode batch statistics,
# norm_before=True, activation='lk_relu'); scale='up'/'down', other norm/activation
# branches, and BatchNorm running-stat tracking are not translated.

if __name__ == "__main__":
    key = jax.random.PRNGKey(0)
    kx, kw, kb = jax.random.split(key, 3)

    N, CIN, H, W = 2, 4, 16, 16
    COUT = 8
    bound = (CIN * 9) ** -0.5
    x = jax.random.normal(kx, (N, CIN, H, W), jnp.float32)
    weight = jax.random.uniform(kw, (COUT, CIN, 3, 3), jnp.float32, -bound, bound)
    bias = jax.random.uniform(kb, (COUT,), jnp.float32, -bound, bound)

    out = conv2d_layer2(x, weight, bias, tile_h=8)   # tile_h=8 -> 2 row-tiles per image
    out = jax.block_until_ready(out)
    assert out.shape == (N, COUT, H, W) and out.dtype == jnp.float32

    ref = _reference(x, weight, bias)
    max_err = float(jnp.max(jnp.abs(out - ref)))
    if not (max_err < 2e-2):
        raise AssertionError(f"kernel/reference mismatch: max abs err = {max_err}")
    print("KERNEL_OK")
</pallas_src>

<mosaic_0001>
module attributes {stable_mosaic.version = 11 : i64} {
  func.func @_conv_bias_stats_kernel(%arg0: i32, %arg1: i32, %arg2: memref<1x16x18x4xbf16, #tpu.memory_space<vmem>>, %arg3: memref<9x4x128xbf16, #tpu.memory_space<vmem>>, %arg4: memref<1x128xf32, #tpu.memory_space<vmem>>, %arg5: memref<1x8x16x128xf32, #tpu.memory_space<vmem>>, %arg6: memref<1x1x2x128xf32, #tpu.memory_space<vmem>>) attributes {dimension_semantics = [#tpu.dimension_semantics<parallel>, #tpu.dimension_semantics<parallel>], iteration_bounds = array<i64: 2, 2>, scalar_prefetch = 0 : i64, scratch_operands = 0 : i64, tpu.core_type = #tpu.core_type<tc>, window_params = [{transform_indices = @transform_0, window_bounds = array<i64: 1, 16, 18, 4>}, {pipeline_mode = #tpu.pipeline_mode<synchronous>, transform_indices = @transform_1, window_bounds = array<i64: 9, 4, 128>}, {pipeline_mode = #tpu.pipeline_mode<synchronous>, transform_indices = @transform_2, window_bounds = array<i64: 1, 128>}, {transform_indices = @transform_3, window_bounds = array<i64: 1, 8, 16, 128>}, {transform_indices = @transform_4, window_bounds = array<i64: 1, 1, 2, 128>}]} {
    %c8_i32 = arith.constant 8 : i32
    %0 = arith.muli %arg1, %c8_i32 : i32
    %c0_i32 = arith.constant 0 : i32
    %1 = arith.cmpi eq, %arg1, %c0_i32 : i32
    %c1_i32 = arith.constant 1 : i32
    %2 = arith.subi %0, %c1_i32 : i32
    %c1_i32_0 = arith.constant 1 : i32
    %3 = arith.select %1, %c1_i32_0, %2 : i32
    %c1_i32_1 = arith.constant 1 : i32
    %4 = arith.cmpi eq, %arg1, %c1_i32_1 : i32
    %c8_i32_2 = arith.constant 8 : i32
    %5 = arith.addi %0, %c8_i32_2 : i32
    %c14_i32 = arith.constant 14 : i32
    %6 = arith.select %4, %c14_i32, %5 : i32
    %c0 = arith.constant 0 : index
    %7 = arith.index_cast %3 : i32 to index
    %c0_3 = arith.constant 0 : index
    %c0_4 = arith.constant 0 : index
    %8 = vector.load %arg2[%c0, %7, %c0_3, %c0_4] : memref<1x16x18x4xbf16, #tpu.memory_space<vmem>>, vector<1x1x18x4xbf16>
    %9 = vector.shape_cast %8 : vector<1x1x18x4xbf16> to vector<1x18x4xbf16>
    %c0_5 = arith.constant 0 : index
    %10 = arith.index_cast %0 : i32 to index
    %c0_6 = arith.constant 0 : index
    %c0_7 = arith.constant 0 : index
    %11 = vector.load %arg2[%c0_5, %10, %c0_6, %c0_7] : memref<1x16x18x4xbf16, #tpu.memory_space<vmem>>, vector<1x8x18x4xbf16>
    %12 = vector.shape_cast %11 : vector<1x8x18x4xbf16> to vector<8x18x4xbf16>
    %c0_8 = arith.constant 0 : index
    %13 = arith.index_cast %6 : i32 to index
    %c0_9 = arith.constant 0 : index
    %c0_10 = arith.constant 0 : index
    %14 = vector.load %arg2[%c0_8, %13, %c0_9, %c0_10] : memref<1x16x18x4xbf16, #tpu.memory_space<vmem>>, vector<1x1x18x4xbf16>
    %15 = vector.shape_cast %14 : vector<1x1x18x4xbf16> to vector<1x18x4xbf16>
    %16 = tpu.concatenate %9, %12, %15 in 0 : vector<1x18x4xbf16>, vector<8x18x4xbf16>, vector<1x18x4xbf16> -> vector<10x18x4xbf16>
    %cst = arith.constant 0.000000e+00 : f32
    %17 = vector.broadcast %cst : f32 to vector<128x128xf32>
    %18 = vector.extract_strided_slice %16 {offsets = [0, 0, 0], sizes = [8, 16, 4], strides = [1, 1, 1]} : vector<10x18x4xbf16> to vector<8x16x4xbf16>
    %19 = vector.shape_cast %18 : vector<8x16x4xbf16> to vector<128x4xbf16>
    %c0_11 = arith.constant 0 : index
    %c0_12 = arith.constant 0 : index
    %c0_13 = arith.constant 0 : index
    %20 = vector.load %arg3[%c0_11, %c0_12, %c0_13] : memref<9x4x128xbf16, #tpu.memory_space<vmem>>, vector<1x4x128xbf16>
    %21 = vector.shape_cast %20 : vector<1x4x128xbf16> to vector<4x128xbf16>
    %cst_14 = arith.constant dense<0.000000e+00> : vector<128x128xf32>
    %22 = tpu.matmul %19, %21, %cst_14 {dimension_numbers = #tpu.dot_dimension_numbers<[1], [0], [0], [1], [0, 0, 1, 1], [], []>} : vector<128x4xbf16>, vector<4x128xbf16>, vector<128x128xf32> -> vector<128x128xf32>
    %23 = arith.addf %17, %22 : vector<128x128xf32>
    %24 = vector.extract_strided_slice %16 {offsets = [0, 1, 0], sizes = [8, 16, 4], strides = [1, 1, 1]} : vector<10x18x4xbf16> to vector<8x16x4xbf16>
    %25 = vector.shape_cast %24 : vector<8x16x4xbf16> to vector<128x4xbf16>
    %c1 = arith.constant 1 : index
    %c0_15 = arith.constant 0 : index
    %c0_16 = arith.constant 0 : index
    %26 = vector.load %arg3[%c1, %c0_15, %c0_16] : memref<9x4x128xbf16, #tpu.memory_space<vmem>>, vector<1x4x128xbf16>
    %27 = vector.shape_cast %26 : vector<1x4x128xbf16> to vector<4x128xbf16>
    %cst_17 = arith.constant dense<0.000000e+00> : vector<128x128xf32>
    %28 = tpu.matmul %25, %27, %cst_17 {dimension_numbers = #tpu.dot_dimension_numbers<[1], [0], [0], [1], [0, 0, 1, 1], [], []>} : vector<128x4xbf16>, vector<4x128xbf16>, vector<128x128xf32> -> vector<128x128xf32>
    %29 = arith.addf %23, %28 : vector<128x128xf32>
    %30 = vector.extract_strided_slice %16 {offsets = [0, 2, 0], sizes = [8, 16, 4], strides = [1, 1, 1]} : vector<10x18x4xbf16> to vector<8x16x4xbf16>
    %31 = vector.shape_cast %30 : vector<8x16x4xbf16> to vector<128x4xbf16>
    %c2 = arith.constant 2 : index
    %c0_18 = arith.constant 0 : index
    %c0_19 = arith.constant 0 : index
    %32 = vector.load %arg3[%c2, %c0_18, %c0_19] : memref<9x4x128xbf16, #tpu.memory_space<vmem>>, vector<1x4x128xbf16>
    %33 = vector.shape_cast %32 : vector<1x4x128xbf16> to vector<4x128xbf16>
    %cst_20 = arith.constant dense<0.000000e+00> : vector<128x128xf32>
    %34 = tpu.matmul %31, %33, %cst_20 {dimension_numbers = #tpu.dot_dimension_numbers<[1], [0], [0], [1], [0, 0, 1, 1], [], []>} : vector<128x4xbf16>, vector<4x128xbf16>, vector<128x128xf32> -> vector<128x128xf32>
    %35 = arith.addf %29, %34 : vector<128x128xf32>
    %36 = vector.extract_strided_slice %16 {offsets = [1, 0, 0], sizes = [8, 16, 4], strides = [1, 1, 1]} : vector<10x18x4xbf16> to vector<8x16x4xbf16>
    %37 = vector.shape_cast %36 : vector<8x16x4xbf16> to vector<128x4xbf16>
    %c3 = arith.constant 3 : index
    %c0_21 = arith.constant 0 : index
    %c0_22 = arith.constant 0 : index
    %38 = vector.load %arg3[%c3, %c0_21, %c0_22] : memref<9x4x128xbf16, #tpu.memory_space<vmem>>, vector<1x4x128xbf16>
    %39 = vector.shape_cast %38 : vector<1x4x128xbf16> to vector<4x128xbf16>
    %cst_23 = arith.constant dense<0.000000e+00> : vector<128x128xf32>
    %40 = tpu.matmul %37, %39, %cst_23 {dimension_numbers = #tpu.dot_dimension_numbers<[1], [0], [0], [1], [0, 0, 1, 1], [], []>} : vector<128x4xbf16>, vector<4x128xbf16>, vector<128x128xf32> -> vector<128x128xf32>
    %41 = arith.addf %35, %40 : vector<128x128xf32>
    %42 = vector.extract_strided_slice %16 {offsets = [1, 1, 0], sizes = [8, 16, 4], strides = [1, 1, 1]} : vector<10x18x4xbf16> to vector<8x16x4xbf16>
    %43 = vector.shape_cast %42 : vector<8x16x4xbf16> to vector<128x4xbf16>
    %c4 = arith.constant 4 : index
    %c0_24 = arith.constant 0 : index
    %c0_25 = arith.constant 0 : index
    %44 = vector.load %arg3[%c4, %c0_24, %c0_25] : memref<9x4x128xbf16, #tpu.memory_space<vmem>>, vector<1x4x128xbf16>
    %45 = vector.shape_cast %44 : vector<1x4x128xbf16> to vector<4x128xbf16>
    %cst_26 = arith.constant dense<0.000000e+00> : vector<128x128xf32>
    %46 = tpu.matmul %43, %45, %cst_26 {dimension_numbers = #tpu.dot_dimension_numbers<[1], [0], [0], [1], [0, 0, 1, 1], [], []>} : vector<128x4xbf16>, vector<4x128xbf16>, vector<128x128xf32> -> vector<128x128xf32>
    %47 = arith.addf %41, %46 : vector<128x128xf32>
    %48 = vector.extract_strided_slice %16 {offsets = [1, 2, 0], sizes = [8, 16, 4], strides = [1, 1, 1]} : vector<10x18x4xbf16> to vector<8x16x4xbf16>
    %49 = vector.shape_cast %48 : vector<8x16x4xbf16> to vector<128x4xbf16>
    %c5 = arith.constant 5 : index
    %c0_27 = arith.constant 0 : index
    %c0_28 = arith.constant 0 : index
    %50 = vector.load %arg3[%c5, %c0_27, %c0_28] : memref<9x4x128xbf16, #tpu.memory_space<vmem>>, vector<1x4x128xbf16>
    %51 = vector.shape_cast %50 : vector<1x4x128xbf16> to vector<4x128xbf16>
    %cst_29 = arith.constant dense<0.000000e+00> : vector<128x128xf32>
    %52 = tpu.matmul %49, %51, %cst_29 {dimension_numbers = #tpu.dot_dimension_numbers<[1], [0], [0], [1], [0, 0, 1, 1], [], []>} : vector<128x4xbf16>, vector<4x128xbf16>, vector<128x128xf32> -> vector<128x128xf32>
    %53 = arith.addf %47, %52 : vector<128x128xf32>
    %54 = vector.extract_strided_slice %16 {offsets = [2, 0, 0], sizes = [8, 16, 4], strides = [1, 1, 1]} : vector<10x18x4xbf16> to vector<8x16x4xbf16>
    %55 = vector.shape_cast %54 : vector<8x16x4xbf16> to vector<128x4xbf16>
    %c6 = arith.constant 6 : index
    %c0_30 = arith.constant 0 : index
    %c0_31 = arith.constant 0 : index
    %56 = vector.load %arg3[%c6, %c0_30, %c0_31] : memref<9x4x128xbf16, #tpu.memory_space<vmem>>, vector<1x4x128xbf16>
    %57 = vector.shape_cast %56 : vector<1x4x128xbf16> to vector<4x128xbf16>
    %cst_32 = arith.constant dense<0.000000e+00> : vector<128x128xf32>
    %58 = tpu.matmul %55, %57, %cst_32 {dimension_numbers = #tpu.dot_dimension_numbers<[1], [0], [0], [1], [0, 0, 1, 1], [], []>} : vector<128x4xbf16>, vector<4x128xbf16>, vector<128x128xf32> -> vector<128x128xf32>
    %59 = arith.addf %53, %58 : vector<128x128xf32>
    %60 = vector.extract_strided_slice %16 {offsets = [2, 1, 0], sizes = [8, 16, 4], strides = [1, 1, 1]} : vector<10x18x4xbf16> to vector<8x16x4xbf16>
    %61 = vector.shape_cast %60 : vector<8x16x4xbf16> to vector<128x4xbf16>
    %c7 = arith.constant 7 : index
    %c0_33 = arith.constant 0 : index
    %c0_34 = arith.constant 0 : index
    %62 = vector.load %arg3[%c7, %c0_33, %c0_34] : memref<9x4x128xbf16, #tpu.memory_space<vmem>>, vector<1x4x128xbf16>
    %63 = vector.shape_cast %62 : vector<1x4x128xbf16> to vector<4x128xbf16>
    %cst_35 = arith.constant dense<0.000000e+00> : vector<128x128xf32>
    %64 = tpu.matmul %61, %63, %cst_35 {dimension_numbers = #tpu.dot_dimension_numbers<[1], [0], [0], [1], [0, 0, 1, 1], [], []>} : vector<128x4xbf16>, vector<4x128xbf16>, vector<128x128xf32> -> vector<128x128xf32>
    %65 = arith.addf %59, %64 : vector<128x128xf32>
    %66 = vector.extract_strided_slice %16 {offsets = [2, 2, 0], sizes = [8, 16, 4], strides = [1, 1, 1]} : vector<10x18x4xbf16> to vector<8x16x4xbf16>
    %67 = vector.shape_cast %66 : vector<8x16x4xbf16> to vector<128x4xbf16>
    %c8 = arith.constant 8 : index
    %c0_36 = arith.constant 0 : index
    %c0_37 = arith.constant 0 : index
    %68 = vector.load %arg3[%c8, %c0_36, %c0_37] : memref<9x4x128xbf16, #tpu.memory_space<vmem>>, vector<1x4x128xbf16>
    %69 = vector.shape_cast %68 : vector<1x4x128xbf16> to vector<4x128xbf16>
    %cst_38 = arith.constant dense<0.000000e+00> : vector<128x128xf32>
    %70 = tpu.matmul %67, %69, %cst_38 {dimension_numbers = #tpu.dot_dimension_numbers<[1], [0], [0], [1], [0, 0, 1, 1], [], []>} : vector<128x4xbf16>, vector<4x128xbf16>, vector<128x128xf32> -> vector<128x128xf32>
    %71 = arith.addf %65, %70 : vector<128x128xf32>
    %c0_39 = arith.constant 0 : index
    %c0_40 = arith.constant 0 : index
    %72 = vector.load %arg4[%c0_39, %c0_40] : memref<1x128xf32, #tpu.memory_space<vmem>>, vector<1x128xf32>
    %73 = vector.broadcast %72 : vector<1x128xf32> to vector<128x128xf32>
    %74 = arith.addf %71, %73 : vector<128x128xf32>
    %cst_41 = arith.constant dense<0.000000e+00> : vector<128xf32>
    %75 = vector.multi_reduction <add>, %74, %cst_41 [0] : vector<128x128xf32> to vector<128xf32>
    %76 = vector.shape_cast %75 : vector<128xf32> to vector<1x128xf32>
    %c0_42 = arith.constant 0 : index
    %c0_43 = arith.constant 0 : index
    %c0_44 = arith.constant 0 : index
    %c0_45 = arith.constant 0 : index
    %77 = vector.load %arg6[%c0_42, %c0_43, %c0_44, %c0_45] : memref<1x1x2x128xf32, #tpu.memory_space<vmem>>, vector<1x1x1x128xf32>
    %78 = vector.shape_cast %77 : vector<1x1x1x128xf32> to vector<1x128xf32>
    %79 = vector.shape_cast %76 : vector<1x128xf32> to vector<1x1x1x128xf32>
    tpu.vector_store %arg6[%c0_42, %c0_43, %c0_44, %c0_45], %79 {strides = array<i32>} : memref<1x1x2x128xf32, #tpu.memory_space<vmem>>, vector<1x1x1x128xf32>,
    %80 = arith.mulf %74, %74 : vector<128x128xf32>
    %cst_46 = arith.constant dense<0.000000e+00> : vector<128xf32>
    %81 = vector.multi_reduction <add>, %80, %cst_46 [0] : vector<128x128xf32> to vector<128xf32>
    %82 = vector.shape_cast %81 : vector<128xf32> to vector<1x128xf32>
    %c0_47 = arith.constant 0 : index
    %c0_48 = arith.constant 0 : index
    %c1_49 = arith.constant 1 : index
    %c0_50 = arith.constant 0 : index
    %83 = vector.load %arg6[%c0_47, %c0_48, %c1_49, %c0_50] : memref<1x1x2x128xf32, #tpu.memory_space<vmem>>, vector<1x1x1x128xf32>
    %84 = vector.shape_cast %83 : vector<1x1x1x128xf32> to vector<1x128xf32>
    %85 = vector.shape_cast %82 : vector<1x128xf32> to vector<1x1x1x128xf32>
    tpu.vector_store %arg6[%c0_47, %c0_48, %c1_49, %c0_50], %85 {strides = array<i32>} : memref<1x1x2x128xf32, #tpu.memory_space<vmem>>, vector<1x1x1x128xf32>,
    %86 = vector.shape_cast %74 : vector<128x128xf32> to vector<8x16x128xf32>
    %c0_51 = arith.constant 0 : index
    %c0_52 = arith.constant 0 : index
    %c0_53 = arith.constant 0 : index
    %c0_54 = arith.constant 0 : index
    %87 = vector.load %arg5[%c0_51, %c0_52, %c0_53, %c0_54] : memref<1x8x16x128xf32, #tpu.memory_space<vmem>>, vector<1x8x16x128xf32>
    %88 = vector.shape_cast %87 : vector<1x8x16x128xf32> to vector<8x16x128xf32>
    %89 = vector.shape_cast %86 : vector<8x16x128xf32> to vector<1x8x16x128xf32>
    tpu.vector_store %arg5[%c0_51, %c0_52, %c0_53, %c0_54], %89 {strides = array<i32>} : memref<1x8x16x128xf32, #tpu.memory_space<vmem>>, vector<1x8x16x128xf32>,
    return
  }
  func.func @transform_0(%arg0: i32, %arg1: i32) -> (i32, i32, i32, i32) {
    %c0_i32 = arith.constant 0 : i32
    %c0_i32_0 = arith.constant 0 : i32
    %c0_i32_1 = arith.constant 0 : i32
    %c0_i32_2 = arith.constant 0 : i32
    return %arg0, %c0_i32, %c0_i32_0, %c0_i32_1 : i32, i32, i32, i32
  }
  func.func @transform_1(%arg0: i32, %arg1: i32) -> (i32, i32, i32) {
    %c0_i32 = arith.constant 0 : i32
    %c0_i32_0 = arith.constant 0 : i32
    %c0_i32_1 = arith.constant 0 : i32
    %c0_i32_2 = arith.constant 0 : i32
    return %c0_i32, %c0_i32_0, %c0_i32_1 : i32, i32, i32
  }
  func.func @transform_2(%arg0: i32, %arg1: i32) -> (i32, i32) {
    %c0_i32 = arith.constant 0 : i32
    %c0_i32_0 = arith.constant 0 : i32
    %c0_i32_1 = arith.constant 0 : i32
    return %c0_i32, %c0_i32_0 : i32, i32
  }
  func.func @transform_3(%arg0: i32, %arg1: i32) -> (i32, i32, i32, i32) {
    %c0_i32 = arith.constant 0 : i32
    %c0_i32_0 = arith.constant 0 : i32
    %c0_i32_1 = arith.constant 0 : i32
    return %arg0, %arg1, %c0_i32, %c0_i32_0 : i32, i32, i32, i32
  }
  func.func @transform_4(%arg0: i32, %arg1: i32) -> (i32, i32, i32, i32) {
    %c0_i32 = arith.constant 0 : i32
    %c0_i32_0 = arith.constant 0 : i32
    %c0_i32_1 = arith.constant 0 : i32
    return %arg0, %arg1, %c0_i32, %c0_i32_0 : i32, i32, i32, i32
  }
}

</mosaic_0001>

<llo_original>
// kernel: tpu_custom_call.1
$region0: #{tpu_custom_call.1}
  #allocation0 [shape = 'u32[]', space=smem, size = 0x4, offset = 0x4, fixed_abs, tag = 'smem constant byte address 0x4 - core index']
  #allocation1 [shape = 'u32[144,128]{1,0:T(1,128)}', space=vmem, size = 0x12000, scoped, tag = 'internal scratch']
  %s0 = inlined_call_operand.vmem [shape: bf16[2,16,18,4], index: 0, kind: input, shape index: {}]
  %s1 = inlined_call_operand.vmem [shape: bf16[9,4,128], index: 1, kind: input, shape index: {}]
  %s2 = inlined_call_operand.vmem [shape: f32[1,128], index: 2, kind: input, shape index: {}]
  %s3 = inlined_call_operand.hbm [shape: f32[2,16,16,128], index: 3, kind: output, shape index: {0}]
  %s4 = inlined_call_operand.hbm [shape: f32[2,2,2,128], index: 4, kind: output, shape index: {1}]
  %5 = xla_tuple %s3, %s4
  %s6 = sld [smem:[#allocation0]]
  $region53: #{tpu_custom_call.1} parent=0
    _
  %s8 = ssub.s32 1, %s6
  %s9 = scalar_select 0, %s8, %s6
  $region1: #{tpu_custom_call.1} parent=0
    #allocation2 [shape = 'u8[131072]{0}', space=vmem, size = 0x20000, scoped, tag = 'output window, operand 0']
    #allocation3 [shape = 's32[2]{0}', space=sflag, size = 0x8, scoped, tag = 'scoped memory for tpu_custom_call.1']
    #allocation4 [shape = 'u8[2048]{0}', space=vmem, size = 0x800, scoped, tag = 'output window, operand 1']
    #allocation5 [shape = 's32[2]{0}', space=sflag, size = 0x8, scoped, tag = 'scoped memory for tpu_custom_call.1']
    %10 = vsyncpa [#allocation3], 0
    %s11 = scalar_lea.sflag [#allocation3], 1
    %12 = vsyncpa %s11, 0
    %13 = vsyncpa [#allocation5], 0
    %s14 = scalar_lea.sflag [#allocation5], 1
    %15 = vsyncpa %s14, 0
    loop: start=0, step=1, limit=6
    $region2: #{tpu_custom_call.1} parent=1 // loop_pre_header
      _
    $region3: #{tpu_custom_call.1} parent=1 // loop_header
      %s17 = sphi 0, %s21
      %p18 = scmp.ge.s32.totalorder %s17, 6
      %s24 = sphi 0, %s36
      %s25 = sphi 0, %s32
      %s26 = sphi 0, %s24
      %s27 = sphi 0, %s25
      %s28 = sphi 0, %s26
      %s29 = sphi 0, %s27
      %s39 = sphi 0, %s41
      %s42 = sphi 0, %s39
      %s43 = sphi 0, %s42
      %s59 = sphi 0, %s43
      %s63 = sphi 0, %s63
      %s65 = sphi 0, %s63
      %s66 = sphi 0, %s65
      %s80 = sphi 0, %s66
      %s84 = sphi 0, %s84
      %s86 = sphi 0, %s84
      %s87 = sphi 0, %s86
      %s101 = sphi 0, %s87
      %s109 = sphi 0, %s111
      %s112 = sphi 0, %s109
      %s113 = sphi 0, %s112
      %s129 = sphi 0, %s113
      %s137 = sphi 0, %s139
      %s140 = sphi 0, %s137
      %s141 = sphi 0, %s140
      %s157 = sphi 0, %s141
    $region4: #{tpu_custom_call.1} parent=1 // loop_header_branch
      %20 = sbr.rel (%p18) target = $region8
    $region5: #{tpu_custom_call.1} parent=1 // loop_body
      %s22 = ssub.s32 %s17, 1
      %s23 = ssub.s32 %s17, 2
      %s30 = sadd.s32 1, %s25
      %p31 = scmp.ge.s32.totalorder %s30, 2
      %s32 = scalar_select %p31, 0, %s30
      %s33 = sadd.s32 1, %s24
      %s34 = scalar_select %p31, %s33, %s24
      %p35 = scmp.ge.s32.totalorder %s34, 2
      %s36 = scalar_select %p35, 0, %s34
      %s37 = ssub.s32 %s24, %s36
      %p38 = scmp.eq.s32.totalorder %s37, 0
      %s40 = sadd.s32 %s39, 1
      %s41 = scalar_select %p38, %s39, %s40
      %p44 = pneg %p38
      %p45 = scmp.eq.s32.totalorder %s17, 3
      %p46 = por %p44, %p45
      %p47 = scmp.ne.s32.totalorder %s39, %s42
      %p48 = scmp.eq.s32.totalorder %s17, 0
      %p49 = por %p47, %p48
      %p50 = scmp.ne.s32.totalorder %s39, %s42
      %p51 = scmp.eq.s32.totalorder %s22, 3
      %p52 = por %p50, %p51
      %p53 = scmp.ne.s32.totalorder %s42, %s43
      %p54 = scmp.eq.s32.totalorder %s22, 0
      %p55 = por %p53, %p54
      %p56 = scmp.ne.s32.totalorder %s42, %s43
      %p57 = scmp.eq.s32.totalorder %s23, 3
      %p58 = por %p56, %p57
      %p60 = scmp.ne.s32.totalorder %s43, %s59
      %p61 = scmp.eq.s32.totalorder %s23, 0
      %p62 = por %p60, %p61
      %s64 = sadd.s32 %s63, 1
      %p67 = scmp.eq.s32.totalorder %s17, 3
      %p68 = scmp.ne.s32.totalorder %s63, %s65
      %p69 = scmp.eq.s32.totalorder %s17, 0
      %p70 = por %p68, %p69
      %p71 = scmp.ne.s32.totalorder %s63, %s65
      %p72 = scmp.eq.s32.totalorder %s22, 3
      %p73 = por %p71, %p72
      %p74 = scmp.ne.s32.totalorder %s65, %s66
      %p75 = scmp.eq.s32.totalorder %s22, 0
      %p76 = por %p74, %p75
      %p77 = scmp.ne.s32.totalorder %s65, %s66
      %p78 = scmp.eq.s32.totalorder %s23, 3
      %p79 = por %p77, %p78
      %p81 = scmp.ne.s32.totalorder %s66, %s80
      %p82 = scmp.eq.s32.totalorder %s23, 0
      %p83 = por %p81, %p82
      %s85 = sadd.s32 %s84, 1
      %p88 = scmp.eq.s32.totalorder %s17, 3
      %p89 = scmp.ne.s32.totalorder %s84, %s86
      %p90 = scmp.eq.s32.totalorder %s17, 0
      %p91 = por %p89, %p90
      %p92 = scmp.ne.s32.totalorder %s84, %s86
      %p93 = scmp.eq.s32.totalorder %s22, 3
      %p94 = por %p92, %p93
      %p95 = scmp.ne.s32.totalorder %s86, %s87
      %p96 = scmp.eq.s32.totalorder %s22, 0
      %p97 = por %p95, %p96
      %p98 = scmp.ne.s32.totalorder %s86, %s87
      %p99 = scmp.eq.s32.totalorder %s23, 3
      %p100 = por %p98, %p99
      %p102 = scmp.ne.s32.totalorder %s87, %s101
      %p103 = scmp.eq.s32.totalorder %s23, 0
      %p104 = por %p102, %p103
      %s105 = ssub.s32 %s24, %s36
      %s106 = ssub.s32 %s25, %s32
      %s107 = sor.u32 %s105, %s106
      %p108 = scmp.eq.s32.totalorder %s107, 0
      %s110 = sadd.s32 %s109, 1
      %s111 = scalar_select %p108, %s109, %s110
      %p114 = pneg %p108
      %p115 = scmp.eq.s32.totalorder %s17, 3
      %p116 = por %p114, %p115
      %p117 = scmp.ne.s32.totalorder %s109, %s112
      %p118 = scmp.eq.s32.totalorder %s17, 0
      %p119 = por %p117, %p118
      %p120 = scmp.ne.s32.totalorder %s109, %s112
      %p121 = scmp.eq.s32.totalorder %s22, 3
      %p122 = por %p120, %p121
      %p123 = scmp.ne.s32.totalorder %s112, %s113
      %p124 = scmp.eq.s32.totalorder %s22, 0
      %p125 = por %p123, %p124
      %p126 = scmp.ne.s32.totalorder %s112, %s113
      %p127 = scmp.eq.s32.totalorder %s23, 3
      %p128 = por %p126, %p127
      %p130 = scmp.ne.s32.totalorder %s113, %s129
      %p131 = scmp.eq.s32.totalorder %s23, 0
      %p132 = por %p130, %p131
      %s133 = ssub.s32 %s24, %s36
      %s134 = ssub.s32 %s25, %s32
      %s135 = sor.u32 %s133, %s134
      %p136 = scmp.eq.s32.totalorder %s135, 0
      %s138 = sadd.s32 %s137, 1
      %s139 = scalar_select %p136, %s137, %s138
      %p142 = pneg %p136
      %p143 = scmp.eq.s32.totalorder %s17, 3
      %p144 = por %p142, %p143
      %p145 = scmp.ne.s32.totalorder %s137, %s140
      %p146 = scmp.eq.s32.totalorder %s17, 0
      %p147 = por %p145, %p146
      %p148 = scmp.ne.s32.totalorder %s137, %s140
      %p149 = scmp.eq.s32.totalorder %s22, 3
      %p150 = por %p148, %p149
      %p151 = scmp.ne.s32.totalorder %s140, %s141
      %p152 = scmp.eq.s32.totalorder %s22, 0
      %p153 = por %p151, %p152
      %p154 = scmp.ne.s32.totalorder %s140, %s141
      %p155 = scmp.eq.s32.totalorder %s23, 3
      %p156 = por %p154, %p155
      %p158 = scmp.ne.s32.totalorder %s141, %s157
      %p159 = scmp.eq.s32.totalorder %s23, 0
      %p160 = por %p158, %p159
      %p161 = scmp.le.s32.totalorder 1, %s17
      %p162 = scmp.lt.s32.totalorder %s17, 5
      %p163 = pnand %p161, %p162
      %p164 = pneg %p163
      // Predicated region
      $region9: #{tpu_custom_call.1} parent=5 // pred_check
        _
      $region10: #{tpu_custom_call.1} parent=5 // pred_check_branch
        %166 = sbr.rel (%p163) target = $region12
      $region11: #{tpu_custom_call.1} parent=5 // pred_region
        %s167 = ssub.s32 %s17, 1
        // Predicated region
        $region13: #{tpu_custom_call.1} parent=11 // pred_check
          %p168 = pneg %p76
        $region14: #{tpu_custom_call.1} parent=11 // pred_check_branch
          %170 = sbr.rel (%p168) target = $region16
        $region15: #{tpu_custom_call.1} parent=11 // pred_region
          _
        $region16: #{tpu_custom_call.1} parent=11 // pred_fallthru
          _
        // Predicated region
        $region17: #{tpu_custom_call.1} parent=11 // pred_check
          %p171 = pneg %p97
        $region18: #{tpu_custom_call.1} parent=11 // pred_check_branch
          %173 = sbr.rel (%p171) target = $region20
        $region19: #{tpu_custom_call.1} parent=11 // pred_region
          _
        $region20: #{tpu_custom_call.1} parent=11 // pred_fallthru
          _
      $region12: #{tpu_custom_call.1} parent=5 // pred_fallthru
        _
      %p174 = scmp.lt.s32.totalorder %s17, 4
      // Predicated region
      $region21: #{tpu_custom_call.1} parent=5 // pred_check
        %p175 = pneg %p174
      $region22: #{tpu_custom_call.1} parent=5 // pred_check_branch
        %177 = sbr.rel (%p175) target = $region24
      $region23: #{tpu_custom_call.1} parent=5 // pred_region
        // Predicated region
        $region25: #{tpu_custom_call.1} parent=23 // pred_check
          %p178 = pneg %p49
        $region26: #{tpu_custom_call.1} parent=23 // pred_check_branch
          %180 = sbr.rel (%p178) target = $region28
        $region27: #{tpu_custom_call.1} parent=23 // pred_region
          %p181 = scmp.lt.s32.totalorder %s24, 1
          %s182 = scalar_select %p181, %s24, 1
          %s183 = smul.addr %s182, 48
          %s184 = smul.addr %s183, 4
          %s185 = scalar_lea.vmem %s0, %s184
        $region28: #{tpu_custom_call.1} parent=23 // pred_fallthru
          _
      $region24: #{tpu_custom_call.1} parent=5 // pred_fallthru
        _
      %p186 = scmp.le.s32.totalorder 1, %s17
      %p187 = scmp.lt.s32.totalorder %s17, 5
      %p188 = pnand %p186, %p187
      %p189 = pneg %p188
      // Predicated region
      $region29: #{tpu_custom_call.1} parent=5 // pred_check
        _
      $region30: #{tpu_custom_call.1} parent=5 // pred_check_branch
        %191 = sbr.rel (%p188) target = $region32
      $region31: #{tpu_custom_call.1} parent=5 // pred_region
        %s192 = ssub.s32 %s17, 1
        %p193 = scmp.lt.s32.totalorder %s26, 1
        %s194 = scalar_select %p193, %s26, 1
        %s195 = smul.addr %s194, 48
        %s196 = smul.addr %s195, 4
        %s197 = scalar_lea.vmem %s0, %s196
        %p198 = pneg %p55
        %p199 = pneg %p52
        %p200 = pneg %p76
        %p201 = pneg %p73
        %p202 = pneg %p97
        %p203 = pneg %p94
        %p204 = pneg %p125
        %p205 = pneg %p122
        %s206 = sand.u32 %s112, 1
        %s207 = scalar_lea.sflag [#allocation3], %s206
        %s208 = sand.u32 %s112, 1
        %s209 = smul.addr %s208, 128
        %s210 = scalar_lea.vmem [#allocation2], %s209
        %p211 = pneg %p153
        %p212 = pneg %p150
        %s213 = sand.u32 %s140, 1
        %s214 = scalar_lea.sflag [#allocation5], %s213
        %s215 = sand.u32 %s140, 1
        %s216 = smul.addr %s215, 2
        %s217 = scalar_lea.vmem [#allocation4], %s216
        %p218 = scmp.lt.s32.totalorder %s26, 1
        %s219 = scalar_select %p218, %s26, 1
        %s220 = smul.addr %s219, 48
        %s221 = smul.addr %s220, 4
        %s222 = scalar_lea.vmem %s0, %s221
        %s223 = smul.u32 8, %s27
        %s225 = smul.u32 %s27, 8
        %p226 = scmp.eq.s32.totalorder %s27, 0
        %s227 = ssub.s32 %s225, 1
        %s228 = scalar_select %p226, 1, %s227
        %p229 = scmp.eq.s32.totalorder %s27, 1
        %s230 = sadd.s32 %s225, 8
        %s231 = scalar_select %p229, 14, %s230
        %s232 = smul.u32 %s228, 3
        %s233 = smul.addr %s232, 4
        %s234 = scalar_lea.vmem %s222, %s233
        %v235 = vld [vmem:[%s234] sm:$0xf]
        %v236 = vld [vmem:[%s234 + $0x4] sm:$0xf]
        %v237 = vld [vmem:[%s234 + $0x8] sm:$0x1]
        %s238 = smul.u32 %s225, 3
        %s239 = smul.addr %s238, 4
        %s240 = scalar_lea.vmem %s222, %s239
        %v241 = vld [vmem:[%s240] sm:$0xf]
        %v242 = vld [vmem:[%s240 + $0x4] sm:$0xf]
        %v243 = vld [vmem:[%s240 + $0x8] sm:$0x1]
        %v244 = vld [vmem:[%s240 + $0xc] sm:$0xf]
        %v245 = vld [vmem:[%s240 + $0x10] sm:$0xf]
        %v246 = vld [vmem:[%s240 + $0x14] sm:$0x1]
        %v247 = vld [vmem:[%s240 + $0x18] sm:$0xf]
        %v248 = vld [vmem:[%s240 + $0x1c] sm:$0xf]
        %v249 = vld [vmem:[%s240 + $0x20] sm:$0x1]
        %v250 = vld [vmem:[%s240 + $0x24] sm:$0xf]
        %v251 = vld [vmem:[%s240 + $0x28] sm:$0xf]
        %v252 = vld [vmem:[%s240 + $0x2c] sm:$0x1]
        %v253 = vld [vmem:[%s240 + $0x30] sm:$0xf]
        %v254 = vld [vmem:[%s240 + $0x34] sm:$0xf]
        %v255 = vld [vmem:[%s240 + $0x38] sm:$0x1]
        %v256 = vld [vmem:[%s240 + $0x3c] sm:$0xf]
        %v257 = vld [vmem:[%s240 + $0x40] sm:$0xf]
        %v258 = vld [vmem:[%s240 + $0x44] sm:$0x1]
        %v259 = vld [vmem:[%s240 + $0x48] sm:$0xf]
        %v260 = vld [vmem:[%s240 + $0x4c] sm:$0xf]
        %v261 = vld [vmem:[%s240 + $0x50] sm:$0x1]
        %v262 = vld [vmem:[%s240 + $0x54] sm:$0xf]
        %v263 = vld [vmem:[%s240 + $0x58] sm:$0xf]
        %v264 = vld [vmem:[%s240 + $0x5c] sm:$0x1]
        %s265 = smul.u32 %s231, 3
        %s266 = smul.addr %s265, 4
        %s267 = scalar_lea.vmem %s222, %s266
        %v268 = vld [vmem:[%s267] sm:$0xf]
        %v269 = vld [vmem:[%s267 + $0x4] sm:$0xf]
        %v270 = vld [vmem:[%s267 + $0x8] sm:$0x1]
        %v271 = vld [vmem:[%s1] sm:$0x3]
        %vm272 = vsmask.f32 3328
        %vm273 = vsmask.f32 7440
        %vm274 = vmor %vm272, %vm273
        %v276 = vshrl.u32 %v235, 16
        %v278 = vrot.slane %v276, 4
        %v279 = vshll.u32 %v235, 16
        %v281 = vrot.slane %v279, 5
        %v282 = vor.u32 %v278, %v281
        %v283 = vrot.slane %v282, 4
        %v285 = vshll.u32 %v236, 16
        %v287 = vrot.slane %v285, 5
        %v288 = vsel %vm274, %v283, %v287
        %v289 = vshrl.u32 %v236, 16
        %v291 = vrot.slane %v289, 4
        %v292 = vor.u32 %v291, %v287
        %v293 = vrot.slane %v292, 4
        %v295 = vshll.u32 %v237, 16
        %v297 = vrot.slane %v295, 5
        %v298 = vsel %vm274, %v293, %v297
        %v300 = vshrl.u32 %v241, 16
        %v302 = vrot.slane %v300, 4
        %v303 = vshll.u32 %v241, 16
        %v305 = vrot.slane %v303, 5
        %v306 = vor.u32 %v302, %v305
        %v307 = vrot.slane %v306, 4
        %v309 = vshll.u32 %v242, 16
        %v311 = vrot.slane %v309, 5
        %v312 = vsel %vm274, %v307, %v311
        %v313 = vshrl.u32 %v242, 16
        %v315 = vrot.slane %v313, 4
        %v316 = vor.u32 %v315, %v311
        %v317 = vrot.slane %v316, 4
        %v319 = vshll.u32 %v243, 16
        %v321 = vrot.slane %v319, 5
        %v322 = vsel %vm274, %v317, %v321
        %v324 = vshrl.u32 %v244, 16
        %v326 = vrot.slane %v324, 4
        %v327 = vshll.u32 %v244, 16
        %v329 = vrot.slane %v327, 5
        %v330 = vor.u32 %v326, %v329
        %v331 = vrot.slane %v330, 4
        %v333 = vshll.u32 %v245, 16
        %v335 = vrot.slane %v333, 5
        %v336 = vsel %vm274, %v331, %v335
        %v337 = vshrl.u32 %v245, 16
        %v339 = vrot.slane %v337, 4
        %v340 = vor.u32 %v339, %v335
        %v341 = vrot.slane %v340, 4
        %v343 = vshll.u32 %v246, 16
        %v345 = vrot.slane %v343, 5
        %v346 = vsel %vm274, %v341, %v345
        %v348 = vshrl.u32 %v247, 16
        %v350 = vrot.slane %v348, 4
        %v351 = vshll.u32 %v247, 16
        %v353 = vrot.slane %v351, 5
        %v354 = vor.u32 %v350, %v353
        %v355 = vrot.slane %v354, 4
        %v357 = vshll.u32 %v248, 16
        %v359 = vrot.slane %v357, 5
        %v360 = vsel %vm274, %v355, %v359
        %v361 = vshrl.u32 %v248, 16
        %v363 = vrot.slane %v361, 4
        %v364 = vor.u32 %v363, %v359
        %v365 = vrot.slane %v364, 4
        %v367 = vshll.u32 %v249, 16
        %v369 = vrot.slane %v367, 5
        %v370 = vsel %vm274, %v365, %v369
        %v372 = vshrl.u32 %v250, 16
        %v374 = vrot.slane %v372, 4
        %v375 = vshll.u32 %v250, 16
        %v377 = vrot.slane %v375, 5
        %v378 = vor.u32 %v374, %v377
        %v379 = vrot.slane %v378, 4
        %v381 = vshll.u32 %v251, 16
        %v383 = vrot.slane %v381, 5
        %v384 = vsel %vm274, %v379, %v383
        %v385 = vshrl.u32 %v251, 16
        %v387 = vrot.slane %v385, 4
        %v388 = vor.u32 %v387, %v383
        %v389 = vrot.slane %v388, 4
        %v391 = vshll.u32 %v252, 16
        %v393 = vrot.slane %v391, 5
        %v394 = vsel %vm274, %v389, %v393
        %v396 = vshrl.u32 %v253, 16
        %v398 = vrot.slane %v396, 4
        %v399 = vshll.u32 %v253, 16
        %v401 = vrot.slane %v399, 5
        %v402 = vor.u32 %v398, %v401
        %v403 = vrot.slane %v402, 4
        %v405 = vshll.u32 %v254, 16
        %v407 = vrot.slane %v405, 5
        %v408 = vsel %vm274, %v403, %v407
        %v409 = vshrl.u32 %v254, 16
        %v411 = vrot.slane %v409, 4
        %v412 = vor.u32 %v411, %v407
        %v413 = vrot.slane %v412, 4
        %v415 = vshll.u32 %v255, 16
        %v417 = vrot.slane %v415, 5
        %v418 = vsel %vm274, %v413, %v417
        %v420 = vshrl.u32 %v256, 16
        %v422 = vrot.slane %v420, 4
        %v423 = vshll.u32 %v256, 16
        %v425 = vrot.slane %v423, 5
        %v426 = vor.u32 %v422, %v425
        %v427 = vrot.slane %v426, 4
        %v429 = vshll.u32 %v257, 16
        %v431 = vrot.slane %v429, 5
        %v432 = vsel %vm274, %v427, %v431
        %v433 = vshrl.u32 %v257, 16
        %v435 = vrot.slane %v433, 4
        %v436 = vor.u32 %v435, %v431
        %v437 = vrot.slane %v436, 4
        %v439 = vshll.u32 %v258, 16
        %v441 = vrot.slane %v439, 5
        %v442 = vsel %vm274, %v437, %v441
        %v444 = vshrl.u32 %v259, 16
        %v446 = vrot.slane %v444, 4
        %v447 = vshll.u32 %v259, 16
        %v449 = vrot.slane %v447, 5
        %v450 = vor.u32 %v446, %v449
        %v451 = vrot.slane %v450, 4
        %v453 = vshll.u32 %v260, 16
        %v455 = vrot.slane %v453, 5
        %v456 = vsel %vm274, %v451, %v455
        %v457 = vshrl.u32 %v260, 16
        %v459 = vrot.slane %v457, 4
        %v460 = vor.u32 %v459, %v455
        %v461 = vrot.slane %v460, 4
        %v463 = vshll.u32 %v261, 16
        %v465 = vrot.slane %v463, 5
        %v466 = vsel %vm274, %v461, %v465
        %s467 = scalar_lea.vmem %s1, 2
        %v468 = vld [vmem:[%s467] sm:$0x3]
        %v469 = vunpack.c.l.b16 %v288
        %v470 = vunpack.c.l.b16 %v298
        %v471 = vunpack.c.l.b16 %v312
        %v472 = vunpack.c.l.b16 %v322
        %v473 = vunpack.c.l.b16 %v336
        %v474 = vunpack.c.l.b16 %v346
        %v475 = vunpack.c.l.b16 %v360
        %v476 = vunpack.c.l.b16 %v370
        %v477 = vunpack.c.l.b16 %v384
        %v478 = vunpack.c.l.b16 %v394
        %v479 = vunpack.c.l.b16 %v408
        %v480 = vunpack.c.l.b16 %v418
        %v481 = vunpack.c.l.b16 %v432
        %v482 = vunpack.c.l.b16 %v442
        %v483 = vunpack.c.l.b16 %v456
        %v484 = vunpack.c.l.b16 %v466
        %v485 = vpack.c.b16 %v470, %v469
        %v486 = vpack.c.b16 %v472, %v471
        %v487 = vpack.c.b16 %v474, %v473
        %v488 = vpack.c.b16 %v476, %v475
        %v489 = vpack.c.b16 %v478, %v477
        %v490 = vpack.c.b16 %v480, %v479
        %v491 = vpack.c.b16 %v482, %v481
        %v492 = vpack.c.b16 %v484, %v483
        %vm493 = vcmask 31744
        %v495 = vsel %vm493, %v485, 0
        %v498 = vsel %vm493, %v486, 0
        %v501 = vsel %vm493, %v487, 0
        %v504 = vsel %vm493, %v488, 0
        %v507 = vsel %vm493, %v489, 0
        %v510 = vsel %vm493, %v490, 0
        %v513 = vsel %vm493, %v491, 0
        %v516 = vsel %vm493, %v492, 0
        %vm518 = vcmask 1041408
        %v520 = vsel %vm518, %v468, 0
        %522 = vmatprep.subr.bf16.mxu0 0
        %523 = vmatpush1.bf16.msra.mxu0 %v520
        %524 = vmatprep.subr.bf16.mxu0 0
        %525 = vmatpush1.bf16.msra.mxu0 0
        %526 = vmatprep.subr.bf16.mxu0 0
        %527 = vmatpush1.bf16.msra.mxu0 0
        %528 = vmatprep.subr.bf16.mxu0 0
        %529 = vmatpush1.bf16.msra.mxu0 0
        %530 = vmatprep.subr.bf16.mxu0 0
        %531 = vmatpush1.bf16.msra.mxu0 0
        %532 = vmatprep.subr.bf16.mxu0 0
        %533 = vmatpush1.bf16.msra.mxu0 0
        %534 = vmatprep.subr.bf16.mxu0 0
        %535 = vmatpush1.bf16.msra.mxu0 0
        %536 = vmatprep.subr.bf16.mxu0 0
        %537 = vmatpush1.bf16.msra.mxu0 0
        %538 = vmatprep.subr.bf16.mxu0 0
        %539 = vmatpush1.bf16.msra.mxu0 0
        %540 = vmatprep.subr.bf16.mxu0 0
        %541 = vmatpush1.bf16.msra.mxu0 0
        %542 = vmatprep.subr.bf16.mxu0 0
        %543 = vmatpush1.bf16.msra.mxu0 0
        %544 = vmatprep.subr.bf16.mxu0 0
        %545 = vmatpush1.bf16.msra.mxu0 0
        %546 = vmatprep.subr.bf16.mxu0 0
        %547 = vmatpush1.bf16.msra.mxu0 0
        %548 = vmatprep.subr.bf16.mxu0 0
        %549 = vmatpush1.bf16.msra.mxu0 0
        %550 = vmatprep.subr.bf16.mxu0 0
        %551 = vmatpush1.bf16.msra.mxu0 0
        %552 = vmatprep.subr.bf16.mxu0 0
        %553 = vmatpush1.bf16.msra.mxu0 0
        %554 = vmatprep.mubr.bf16.mxu0 0
        %555 = vmatmul.mubr.bf16.gmra.mrb[0].mxu0 %v495
        %v556 = vpop.f32.mrb[0].mxu0
        %v557 = vadd.f32 0.0, %v556
        %v558 = vpop.f32.mrb[0].mxu0
        %v559 = vpop.f32.mrb[0].mxu0
        %v560 = vadd.f32 0.0, %v559
        %v561 = vpop.f32.mrb[0].mxu0
        %562 = vmatprep.mubr.bf16.mxu0 0
        %563 = vmatmul.mubr.bf16.gmra.mrb[0].mxu0 %v498
        %v564 = vpop.f32.mrb[0].mxu0
        %v565 = vadd.f32 0.0, %v564
        %v566 = vpop.f32.mrb[0].mxu0
        %v567 = vpop.f32.mrb[0].mxu0
        %v568 = vadd.f32 0.0, %v567
        %v569 = vpop.f32.mrb[0].mxu0
        %570 = vmatprep.mubr.bf16.mxu0 0
        %571 = vmatmul.mubr.bf16.gmra.mrb[0].mxu0 %v501
        %v572 = vpop.f32.mrb[0].mxu0
        %v573 = vadd.f32 0.0, %v572
        %v574 = vpop.f32.mrb[0].mxu0
        %v575 = vpop.f32.mrb[0].mxu0
        %v576 = vadd.f32 0.0, %v575
        %v577 = vpop.f32.mrb[0].mxu0
        %578 = vmatprep.mubr.bf16.mxu0 0
        %579 = vmatmul.mubr.bf16.gmra.mrb[0].mxu0 %v504
        %v580 = vpop.f32.mrb[0].mxu0
        %v581 = vadd.f32 0.0, %v580
        %v582 = vpop.f32.mrb[0].mxu0
        %v583 = vpop.f32.mrb[0].mxu0
        %v584 = vadd.f32 0.0, %v583
        %v585 = vpop.f32.mrb[0].mxu0
        %586 = vmatprep.mubr.bf16.mxu0 0
        %587 = vmatmul.mubr.bf16.gmra.mrb[0].mxu0 %v507
        %v588 = vpop.f32.mrb[0].mxu0
        %v589 = vadd.f32 0.0, %v588
        %v590 = vpop.f32.mrb[0].mxu0
        %v591 = vpop.f32.mrb[0].mxu0
        %v592 = vadd.f32 0.0, %v591
        %v593 = vpop.f32.mrb[0].mxu0
        %594 = vmatprep.mubr.bf16.mxu0 0
        %595 = vmatmul.mubr.bf16.gmra.mrb[0].mxu0 %v510
        %v596 = vpop.f32.mrb[0].mxu0
        %v597 = vadd.f32 0.0, %v596
        %v598 = vpop.f32.mrb[0].mxu0
        %v599 = vpop.f32.mrb[0].mxu0
        %v600 = vadd.f32 0.0, %v599
        %v601 = vpop.f32.mrb[0].mxu0
        %602 = vmatprep.mubr.bf16.mxu0 0
        %603 = vmatmul.mubr.bf16.gmra.mrb[0].mxu0 %v513
        %v604 = vpop.f32.mrb[0].mxu0
        %v605 = vadd.f32 0.0, %v604
        %v606 = vpop.f32.mrb[0].mxu0
        %v607 = vpop.f32.mrb[0].mxu0
        %v608 = vadd.f32 0.0, %v607
        %v609 = vpop.f32.mrb[0].mxu0
        %610 = vmatprep.mubr.bf16.mxu0 0
        %611 = vmatmul.mubr.bf16.gmra.mrb[0].mxu0 %v516
        %v612 = vpop.f32.mrb[0].mxu0
        %v613 = vadd.f32 0.0, %v612
        %v614 = vpop.f32.mrb[0].mxu0
        %v615 = vpop.f32.mrb[0].mxu0
        %v616 = vadd.f32 0.0, %v615
        %v617 = vpop.f32.mrb[0].mxu0
        %618 = vdwg.mxu0
        %v635 = vunpack.c.l.b16 %v235
        %v636 = vunpack.c.l.b16 %v236
        %v637 = vunpack.c.l.b16 %v241
        %v638 = vunpack.c.l.b16 %v242
        %v639 = vunpack.c.l.b16 %v244
        %v640 = vunpack.c.l.b16 %v245
        %v641 = vunpack.c.l.b16 %v247
        %v642 = vunpack.c.l.b16 %v248
        %v643 = vunpack.c.l.b16 %v250
        %v644 = vunpack.c.l.b16 %v251
        %v645 = vunpack.c.l.b16 %v253
        %v646 = vunpack.c.l.b16 %v254
        %v647 = vunpack.c.l.b16 %v256
        %v648 = vunpack.c.l.b16 %v257
        %v649 = vunpack.c.l.b16 %v259
        %v650 = vunpack.c.l.b16 %v260
        %v651 = vpack.c.b16 %v636, %v635
        %v652 = vpack.c.b16 %v638, %v637
        %v653 = vpack.c.b16 %v640, %v639
        %v654 = vpack.c.b16 %v642, %v641
        %v655 = vpack.c.b16 %v644, %v643
        %v656 = vpack.c.b16 %v646, %v645
        %v657 = vpack.c.b16 %v648, %v647
        %v658 = vpack.c.b16 %v650, %v649
        %v660 = vsel %vm493, %v651, 0
        %v663 = vsel %vm493, %v652, 0
        %v666 = vsel %vm493, %v653, 0
        %v669 = vsel %vm493, %v654, 0
        %v672 = vsel %vm493, %v655, 0
        %v675 = vsel %vm493, %v656, 0
        %v678 = vsel %vm493, %v657, 0
        %v681 = vsel %vm493, %v658, 0
        %v684 = vsel %vm518, %v271, 0
        %686 = vmatprep.subr.bf16.mxu0 0
        %687 = vmatpush1.bf16.msra.mxu0 %v684
        %688 = vmatprep.subr.bf16.mxu0 0
        %689 = vmatpush1.bf16.msra.mxu0 0
        %690 = vmatprep.subr.bf16.mxu0 0
        %691 = vmatpush1.bf16.msra.mxu0 0
        %692 = vmatprep.subr.bf16.mxu0 0
        %693 = vmatpush1.bf16.msra.mxu0 0
        %694 = vmatprep.subr.bf16.mxu0 0
        %695 = vmatpush1.bf16.msra.mxu0 0
        %696 = vmatprep.subr.bf16.mxu0 0
        %697 = vmatpush1.bf16.msra.mxu0 0
        %698 = vmatprep.subr.bf16.mxu0 0
        %699 = vmatpush1.bf16.msra.mxu0 0
        %700 = vmatprep.subr.bf16.mxu0 0
        %701 = vmatpush1.bf16.msra.mxu0 0
        %702 = vmatprep.subr.bf16.mxu0 0
        %703 = vmatpush1.bf16.msra.mxu0 0
        %704 = vmatprep.subr.bf16.mxu0 0
        %705 = vmatpush1.bf16.msra.mxu0 0
        %706 = vmatprep.subr.bf16.mxu0 0
        %707 = vmatpush1.bf16.msra.mxu0 0
        %708 = vmatprep.subr.bf16.mxu0 0
        %709 = vmatpush1.bf16.msra.mxu0 0
        %710 = vmatprep.subr.bf16.mxu0 0
        %711 = vmatpush1.bf16.msra.mxu0 0
        %712 = vmatprep.subr.bf16.mxu0 0
        %713 = vmatpush1.bf16.msra.mxu0 0
        %714 = vmatprep.subr.bf16.mxu0 0
        %715 = vmatpush1.bf16.msra.mxu0 0
        %716 = vmatprep.subr.bf16.mxu0 0
        %717 = vmatpush1.bf16.msra.mxu0 0
        %718 = vmatprep.mubr.bf16.mxu0 0
        %719 = vmatmul.mubr.bf16.gmra.mrb[0].mxu0 %v660
        %v720 = vpop.f32.mrb[0].mxu0
        %v721 = vadd.f32 %v557, %v720
        %v722 = vpop.f32.mrb[0].mxu0
        %v723 = vpop.f32.mrb[0].mxu0
        %v724 = vadd.f32 %v560, %v723
        %v725 = vpop.f32.mrb[0].mxu0
        %726 = vmatprep.mubr.bf16.mxu0 0
        %727 = vmatmul.mubr.bf16.gmra.mrb[0].mxu0 %v663
        %v728 = vpop.f32.mrb[0].mxu0
        %v729 = vadd.f32 %v565, %v728
        %v730 = vpop.f32.mrb[0].mxu0
        %v731 = vpop.f32.mrb[0].mxu0
        %v732 = vadd.f32 %v568, %v731
        %v733 = vpop.f32.mrb[0].mxu0
        %734 = vmatprep.mubr.bf16.mxu0 0
        %735 = vmatmul.mubr.bf16.gmra.mrb[0].mxu0 %v666
        %v736 = vpop.f32.mrb[0].mxu0
        %v737 = vadd.f32 %v573, %v736
        %v738 = vpop.f32.mrb[0].mxu0
        %v739 = vpop.f32.mrb[0].mxu0
        %v740 = vadd.f32 %v576, %v739
        %v741 = vpop.f32.mrb[0].mxu0
        %742 = vmatprep.mubr.bf16.mxu0 0
        %743 = vmatmul.mubr.bf16.gmra.mrb[0].mxu0 %v669
        %v744 = vpop.f32.mrb[0].mxu0
        %v745 = vadd.f32 %v581, %v744
        %v746 = vpop.f32.mrb[0].mxu0
        %v747 = vpop.f32.mrb[0].mxu0
        %v748 = vadd.f32 %v584, %v747
        %v749 = vpop.f32.mrb[0].mxu0
        %750 = vmatprep.mubr.bf16.mxu0 0
        %751 = vmatmul.mubr.bf16.gmra.mrb[0].mxu0 %v672
        %v752 = vpop.f32.mrb[0].mxu0
        %v753 = vadd.f32 %v589, %v752
        %v754 = vpop.f32.mrb[0].mxu0
        %v755 = vpop.f32.mrb[0].mxu0
        %v756 = vadd.f32 %v592, %v755
        %v757 = vpop.f32.mrb[0].mxu0
        %758 = vmatprep.mubr.bf16.mxu0 0
        %759 = vmatmul.mubr.bf16.gmra.mrb[0].mxu0 %v675
        %v760 = vpop.f32.mrb[0].mxu0
        %v761 = vadd.f32 %v597, %v760
        %v762 = vpop.f32.mrb[0].mxu0
        %v763 = vpop.f32.mrb[0].mxu0
        %v764 = vadd.f32 %v600, %v763
        %v765 = vpop.f32.mrb[0].mxu0
        %766 = vmatprep.mubr.bf16.mxu0 0
        %767 = vmatmul.mubr.bf16.gmra.mrb[0].mxu0 %v678
        %v768 = vpop.f32.mrb[0].mxu0
        %v769 = vadd.f32 %v605, %v768
        %v770 = vpop.f32.mrb[0].mxu0
        %v771 = vpop.f32.mrb[0].mxu0
        %v772 = vadd.f32 %v608, %v771
        %v773 = vpop.f32.mrb[0].mxu0
        %774 = vmatprep.mubr.bf16.mxu0 0
        %775 = vmatmul.mubr.bf16.gmra.mrb[0].mxu0 %v681
        %v776 = vpop.f32.mrb[0].mxu0
        %v777 = vadd.f32 %v613, %v776
        %v778 = vpop.f32.mrb[0].mxu0
        %v779 = vpop.f32.mrb[0].mxu0
        %v780 = vadd.f32 %v616, %v779
        %v781 = vpop.f32.mrb[0].mxu0
        %782 = vdwg.mxu0
        %vm791 = vcmask 1042432
        %vm792 = vcmask 1046532
        %vm793 = vmor %vm791, %vm792
        %v794 = vrot.slane %v235, 5
        %v795 = vrot.slane %v794, 4
        %v796 = vrot.slane %v236, 5
        %v797 = vsel %vm793, %v795, %v796
        %v798 = vrot.slane %v796, 4
        %v799 = vrot.slane %v237, 5
        %v800 = vsel %vm793, %v798, %v799
        %v801 = vrot.slane %v241, 5
        %v802 = vrot.slane %v801, 4
        %v803 = vrot.slane %v242, 5
        %v804 = vsel %vm793, %v802, %v803
        %v805 = vrot.slane %v803, 4
        %v806 = vrot.slane %v243, 5
        %v807 = vsel %vm793, %v805, %v806
        %v808 = vrot.slane %v244, 5
        %v809 = vrot.slane %v808, 4
        %v810 = vrot.slane %v245, 5
        %v811 = vsel %vm793, %v809, %v810
        %v812 = vrot.slane %v810, 4
        %v813 = vrot.slane %v246, 5
        %v814 = vsel %vm793, %v812, %v813
        %v815 = vrot.slane %v247, 5
        %v816 = vrot.slane %v815, 4
        %v817 = vrot.slane %v248, 5
        %v818 = vsel %vm793, %v816, %v817
        %v819 = vrot.slane %v817, 4
        %v820 = vrot.slane %v249, 5
        %v821 = vsel %vm793, %v819, %v820
        %v822 = vrot.slane %v250, 5
        %v823 = vrot.slane %v822, 4
        %v824 = vrot.slane %v251, 5
        %v825 = vsel %vm793, %v823, %v824
        %v826 = vrot.slane %v824, 4
        %v827 = vrot.slane %v252, 5
        %v828 = vsel %vm793, %v826, %v827
        %v829 = vrot.slane %v253, 5
        %v830 = vrot.slane %v829, 4
        %v831 = vrot.slane %v254, 5
        %v832 = vsel %vm793, %v830, %v831
        %v833 = vrot.slane %v831, 4
        %v834 = vrot.slane %v255, 5
        %v835 = vsel %vm793, %v833, %v834
        %v836 = vrot.slane %v256, 5
        %v837 = vrot.slane %v836, 4
        %v838 = vrot.slane %v257, 5
        %v839 = vsel %vm793, %v837, %v838
        %v840 = vrot.slane %v838, 4
        %v841 = vrot.slane %v258, 5
        %v842 = vsel %vm793, %v840, %v841
        %v843 = vrot.slane %v259, 5
        %v844 = vrot.slane %v843, 4
        %v845 = vrot.slane %v260, 5
        %v846 = vsel %vm793, %v844, %v845
        %v847 = vrot.slane %v845, 4
        %v848 = vrot.slane %v261, 5
        %v849 = vsel %vm793, %v847, %v848
        %s850 = scalar_lea.vmem %s1, 4
        %v851 = vld [vmem:[%s850] sm:$0x3]
        %v852 = vunpack.c.l.b16 %v797
        %v853 = vunpack.c.l.b16 %v800
        %v854 = vunpack.c.l.b16 %v804
        %v855 = vunpack.c.l.b16 %v807
        %v856 = vunpack.c.l.b16 %v811
        %v857 = vunpack.c.l.b16 %v814
        %v858 = vunpack.c.l.b16 %v818
        %v859 = vunpack.c.l.b16 %v821
        %v860 = vunpack.c.l.b16 %v825
        %v861 = vunpack.c.l.b16 %v828
        %v862 = vunpack.c.l.b16 %v832
        %v863 = vunpack.c.l.b16 %v835
        %v864 = vunpack.c.l.b16 %v839
        %v865 = vunpack.c.l.b16 %v842
        %v866 = vunpack.c.l.b16 %v846
        %v867 = vunpack.c.l.b16 %v849
        %v868 = vpack.c.b16 %v853, %v852
        %v869 = vpack.c.b16 %v855, %v854
        %v870 = vpack.c.b16 %v857, %v856
        %v871 = vpack.c.b16 %v859, %v858
        %v872 = vpack.c.b16 %v861, %v860
        %v873 = vpack.c.b16 %v863, %v862
        %v874 = vpack.c.b16 %v865, %v864
        %v875 = vpack.c.b16 %v867, %v866
        %v877 = vsel %vm493, %v868, 0
        %v880 = vsel %vm493, %v869, 0
        %v883 = vsel %vm493, %v870, 0
        %v886 = vsel %vm493, %v871, 0
        %v889 = vsel %vm493, %v872, 0
        %v892 = vsel %vm493, %v873, 0
        %v895 = vsel %vm493, %v874, 0
        %v898 = vsel %vm493, %v875, 0
        %v901 = vsel %vm518, %v851, 0
        %903 = vmatprep.subr.bf16.mxu0 0
        %904 = vmatpush1.bf16.msra.mxu0 %v901
        %905 = vmatprep.subr.bf16.mxu0 0
        %906 = vmatpush1.bf16.msra.mxu0 0
        %907 = vmatprep.subr.bf16.mxu0 0
        %908 = vmatpush1.bf16.msra.mxu0 0
        %909 = vmatprep.subr.bf16.mxu0 0
        %910 = vmatpush1.bf16.msra.mxu0 0
        %911 = vmatprep.subr.bf16.mxu0 0
        %912 = vmatpush1.bf16.msra.mxu0 0
        %913 = vmatprep.subr.bf16.mxu0 0
        %914 = vmatpush1.bf16.msra.mxu0 0
        %915 = vmatprep.subr.bf16.mxu0 0
        %916 = vmatpush1.bf16.msra.mxu0 0
        %917 = vmatprep.subr.bf16.mxu0 0
        %918 = vmatpush1.bf16.msra.mxu0 0
        %919 = vmatprep.subr.bf16.mxu0 0
        %920 = vmatpush1.bf16.msra.mxu0 0
        %921 = vmatprep.subr.bf16.mxu0 0
        %922 = vmatpush1.bf16.msra.mxu0 0
        %923 = vmatprep.subr.bf16.mxu0 0
        %924 = vmatpush1.bf16.msra.mxu0 0
        %925 = vmatprep.subr.bf16.mxu0 0
        %926 = vmatpush1.bf16.msra.mxu0 0
        %927 = vmatprep.subr.bf16.mxu0 0
        %928 = vmatpush1.bf16.msra.mxu0 0
        %929 = vmatprep.subr.bf16.mxu0 0
        %930 = vmatpush1.bf16.msra.mxu0 0
        %931 = vmatprep.subr.bf16.mxu0 0
        %932 = vmatpush1.bf16.msra.mxu0 0
        %933 = vmatprep.subr.bf16.mxu0 0
        %934 = vmatpush1.bf16.msra.mxu0 0
        %935 = vmatprep.mubr.bf16.mxu0 0
        %936 = vmatmul.mubr.bf16.gmra.mrb[0].mxu0 %v877
        %v937 = vpop.f32.mrb[0].mxu0
        %v938 = vadd.f32 0.0, %v937
        %v939 = vpop.f32.mrb[0].mxu0
        %v940 = vpop.f32.mrb[0].mxu0
        %v941 = vadd.f32 0.0, %v940
        %v942 = vpop.f32.mrb[0].mxu0
        %943 = vmatprep.mubr.bf16.mxu0 0
        %944 = vmatmul.mubr.bf16.gmra.mrb[0].mxu0 %v880
        %v945 = vpop.f32.mrb[0].mxu0
        %v946 = vadd.f32 0.0, %v945
        %v947 = vpop.f32.mrb[0].mxu0
        %v948 = vpop.f32.mrb[0].mxu0
        %v949 = vadd.f32 0.0, %v948
        %v950 = vpop.f32.mrb[0].mxu0
        %951 = vmatprep.mubr.bf16.mxu0 0
        %952 = vmatmul.mubr.bf16.gmra.mrb[0].mxu0 %v883
        %v953 = vpop.f32.mrb[0].mxu0
        %v954 = vadd.f32 0.0, %v953
        %v955 = vpop.f32.mrb[0].mxu0
        %v956 = vpop.f32.mrb[0].mxu0
        %v957 = vadd.f32 0.0, %v956
        %v958 = vpop.f32.mrb[0].mxu0
        %959 = vmatprep.mubr.bf16.mxu0 0
        %960 = vmatmul.mubr.bf16.gmra.mrb[0].mxu0 %v886
        %v961 = vpop.f32.mrb[0].mxu0
        %v962 = vadd.f32 0.0, %v961
        %v963 = vpop.f32.mrb[0].mxu0
        %v964 = vpop.f32.mrb[0].mxu0
        %v965 = vadd.f32 0.0, %v964
        %v966 = vpop.f32.mrb[0].mxu0
        %967 = vmatprep.mubr.bf16.mxu0 0
        %968 = vmatmul.mubr.bf16.gmra.mrb[0].mxu0 %v889
        %v969 = vpop.f32.mrb[0].mxu0
        %v970 = vadd.f32 0.0, %v969
        %v971 = vpop.f32.mrb[0].mxu0
        %v972 = vpop.f32.mrb[0].mxu0
        %v973 = vadd.f32 0.0, %v972
        %v974 = vpop.f32.mrb[0].mxu0
        %975 = vmatprep.mubr.bf16.mxu0 0
        %976 = vmatmul.mubr.bf16.gmra.mrb[0].mxu0 %v892
        %v977 = vpop.f32.mrb[0].mxu0
        %v978 = vadd.f32 0.0, %v977
        %v979 = vpop.f32.mrb[0].mxu0
        %v980 = vpop.f32.mrb[0].mxu0
        %v981 = vadd.f32 0.0, %v980
        %v982 = vpop.f32.mrb[0].mxu0
        %983 = vmatprep.mubr.bf16.mxu0 0
        %984 = vmatmul.mubr.bf16.gmra.mrb[0].mxu0 %v895
        %v985 = vpop.f32.mrb[0].mxu0
        %v986 = vadd.f32 0.0, %v985
        %v987 = vpop.f32.mrb[0].mxu0
        %v988 = vpop.f32.mrb[0].mxu0
        %v989 = vadd.f32 0.0, %v988
        %v990 = vpop.f32.mrb[0].mxu0
        %991 = vmatprep.mubr.bf16.mxu0 0
        %992 = vmatmul.mubr.bf16.gmra.mrb[0].mxu0 %v898
        %v993 = vpop.f32.mrb[0].mxu0
        %v994 = vadd.f32 0.0, %v993
        %v995 = vpop.f32.mrb[0].mxu0
        %v996 = vpop.f32.mrb[0].mxu0
        %v997 = vadd.f32 0.0, %v996
        %v998 = vpop.f32.mrb[0].mxu0
        %999 = vdwg.mxu0
        %v1000 = vadd.f32 %v721, %v938
        %v1001 = vadd.f32 %v724, %v941
        %v1002 = vadd.f32 %v729, %v946
        %v1003 = vadd.f32 %v732, %v949
        %v1004 = vadd.f32 %v737, %v954
        %v1005 = vadd.f32 %v740, %v957
        %v1006 = vadd.f32 %v745, %v962
        %v1007 = vadd.f32 %v748, %v965
        %v1008 = vadd.f32 %v753, %v970
        %v1009 = vadd.f32 %v756, %v973
        %v1010 = vadd.f32 %v761, %v978
        %v1011 = vadd.f32 %v764, %v981
        %v1012 = vadd.f32 %v769, %v986
        %v1013 = vadd.f32 %v772, %v989
        %v1014 = vadd.f32 %v777, %v994
        %v1015 = vadd.f32 %v780, %v997
        %s1016 = scalar_lea.vmem %s1, 6
        %v1017 = vld [vmem:[%s1016] sm:$0x3]
        %v1020 = vunpack.c.l.b16 %v262
        %v1021 = vunpack.c.l.b16 %v263
        %v1022 = vpack.c.b16 %v1021, %v1020
        %v1024 = vsel %vm493, %v1022, 0
        %v1027 = vsel %vm518, %v1017, 0
        %1029 = vmatprep.subr.bf16.mxu0 0
        %1030 = vmatpush1.bf16.msra.mxu0 %v1027
        %1031 = vmatprep.subr.bf16.mxu0 0
        %1032 = vmatpush1.bf16.msra.mxu0 0
        %1033 = vmatprep.subr.bf16.mxu0 0
        %1034 = vmatpush1.bf16.msra.mxu0 0
        %1035 = vmatprep.subr.bf16.mxu0 0
        %1036 = vmatpush1.bf16.msra.mxu0 0
        %1037 = vmatprep.subr.bf16.mxu0 0
        %1038 = vmatpush1.bf16.msra.mxu0 0
        %1039 = vmatprep.subr.bf16.mxu0 0
        %1040 = vmatpush1.bf16.msra.mxu0 0
        %1041 = vmatprep.subr.bf16.mxu0 0
        %1042 = vmatpush1.bf16.msra.mxu0 0
        %1043 = vmatprep.subr.bf16.mxu0 0
        %1044 = vmatpush1.bf16.msra.mxu0 0
        %1045 = vmatprep.subr.bf16.mxu0 0
        %1046 = vmatpush1.bf16.msra.mxu0 0
        %1047 = vmatprep.subr.bf16.mxu0 0
        %1048 = vmatpush1.bf16.msra.mxu0 0
        %1049 = vmatprep.subr.bf16.mxu0 0
        %1050 = vmatpush1.bf16.msra.mxu0 0
        %1051 = vmatprep.subr.bf16.mxu0 0
        %1052 = vmatpush1.bf16.msra.mxu0 0
        %1053 = vmatprep.subr.bf16.mxu0 0
        %1054 = vmatpush1.bf16.msra.mxu0 0
        %1055 = vmatprep.subr.bf16.mxu0 0
        %1056 = vmatpush1.bf16.msra.mxu0 0
        %1057 = vmatprep.subr.bf16.mxu0 0
        %1058 = vmatpush1.bf16.msra.mxu0 0
        %1059 = vmatprep.subr.bf16.mxu0 0
        %1060 = vmatpush1.bf16.msra.mxu0 0
        %1061 = vmatprep.mubr.bf16.mxu0 0
        %1062 = vmatmul.mubr.bf16.gmra.mrb[0].mxu0 %v663
        %v1063 = vpop.f32.mrb[0].mxu0
        %v1064 = vadd.f32 0.0, %v1063
        %v1065 = vpop.f32.mrb[0].mxu0
        %v1066 = vpop.f32.mrb[0].mxu0
        %v1067 = vadd.f32 0.0, %v1066
        %v1068 = vpop.f32.mrb[0].mxu0
        %1069 = vmatprep.mubr.bf16.mxu0 0
        %1070 = vmatmul.mubr.bf16.gmra.mrb[0].mxu0 %v666
        %v1071 = vpop.f32.mrb[0].mxu0
        %v1072 = vadd.f32 0.0, %v1071
        %v1073 = vpop.f32.mrb[0].mxu0
        %v1074 = vpop.f32.mrb[0].mxu0
        %v1075 = vadd.f32 0.0, %v1074
        %v1076 = vpop.f32.mrb[0].mxu0
        %1077 = vmatprep.mubr.bf16.mxu0 0
        %1078 = vmatmul.mubr.bf16.gmra.mrb[0].mxu0 %v669
        %v1079 = vpop.f32.mrb[0].mxu0
        %v1080 = vadd.f32 0.0, %v1079
        %v1081 = vpop.f32.mrb[0].mxu0
        %v1082 = vpop.f32.mrb[0].mxu0
        %v1083 = vadd.f32 0.0, %v1082
        %v1084 = vpop.f32.mrb[0].mxu0
        %1085 = vmatprep.mubr.bf16.mxu0 0
        %1086 = vmatmul.mubr.bf16.gmra.mrb[0].mxu0 %v672
        %v1087 = vpop.f32.mrb[0].mxu0
        %v1088 = vadd.f32 0.0, %v1087
        %v1089 = vpop.f32.mrb[0].mxu0
        %v1090 = vpop.f32.mrb[0].mxu0
        %v1091 = vadd.f32 0.0, %v1090
        %v1092 = vpop.f32.mrb[0].mxu0
        %1093 = vmatprep.mubr.bf16.mxu0 0
        %1094 = vmatmul.mubr.bf16.gmra.mrb[0].mxu0 %v675
        %v1095 = vpop.f32.mrb[0].mxu0
        %v1096 = vadd.f32 0.0, %v1095
        %v1097 = vpop.f32.mrb[0].mxu0
        %v1098 = vpop.f32.mrb[0].mxu0
        %v1099 = vadd.f32 0.0, %v1098
        %v1100 = vpop.f32.mrb[0].mxu0
        %1101 = vmatprep.mubr.bf16.mxu0 0
        %1102 = vmatmul.mubr.bf16.gmra.mrb[0].mxu0 %v678
        %v1103 = vpop.f32.mrb[0].mxu0
        %v1104 = vadd.f32 0.0, %v1103
        %v1105 = vpop.f32.mrb[0].mxu0
        %v1106 = vpop.f32.mrb[0].mxu0
        %v1107 = vadd.f32 0.0, %v1106
        %v1108 = vpop.f32.mrb[0].mxu0
        %1109 = vmatprep.mubr.bf16.mxu0 0
        %1110 = vmatmul.mubr.bf16.gmra.mrb[0].mxu0 %v681
        %v1111 = vpop.f32.mrb[0].mxu0
        %v1112 = vadd.f32 0.0, %v1111
        %v1113 = vpop.f32.mrb[0].mxu0
        %v1114 = vpop.f32.mrb[0].mxu0
        %v1115 = vadd.f32 0.0, %v1114
        %v1116 = vpop.f32.mrb[0].mxu0
        %1117 = vmatprep.mubr.bf16.mxu0 0
        %1118 = vmatmul.mubr.bf16.gmra.mrb[0].mxu0 %v1024
        %v1119 = vpop.f32.mrb[0].mxu0
        %v1120 = vadd.f32 0.0, %v1119
        %v1121 = vpop.f32.mrb[0].mxu0
        %v1122 = vpop.f32.mrb[0].mxu0
        %v1123 = vadd.f32 0.0, %v1122
        %v1124 = vpop.f32.mrb[0].mxu0
        %1125 = vdwg.mxu0
        %v1126 = vadd.f32 %v1000, %v1064
        %v1127 = vadd.f32 %v1001, %v1067
        %v1128 = vadd.f32 %v1002, %v1072
        %v1129 = vadd.f32 %v1003, %v1075
        %v1130 = vadd.f32 %v1004, %v1080
        %v1131 = vadd.f32 %v1005, %v1083
        %v1132 = vadd.f32 %v1006, %v1088
        %v1133 = vadd.f32 %v1007, %v1091
        %v1134 = vadd.f32 %v1008, %v1096
        %v1135 = vadd.f32 %v1009, %v1099
        %v1136 = vadd.f32 %v1010, %v1104
        %v1137 = vadd.f32 %v1011, %v1107
        %v1138 = vadd.f32 %v1012, %v1112
        %v1139 = vadd.f32 %v1013, %v1115
        %v1140 = vadd.f32 %v1014, %v1120
        %v1141 = vadd.f32 %v1015, %v1123
        %v1143 = vshrl.u32 %v262, 16
        %v1145 = vrot.slane %v1143, 4
        %v1146 = vshll.u32 %v262, 16
        %v1148 = vrot.slane %v1146, 5
        %v1149 = vor.u32 %v1145, %v1148
        %v1150 = vrot.slane %v1149, 4
        %v1152 = vshll.u32 %v263, 16
        %v1154 = vrot.slane %v1152, 5
        %v1155 = vsel %vm274, %v1150, %v1154
        %v1156 = vshrl.u32 %v263, 16
        %v1158 = vrot.slane %v1156, 4
        %v1159 = vor.u32 %v1158, %v1154
        %v1160 = vrot.slane %v1159, 4
        %v1162 = vshll.u32 %v264, 16
        %v1164 = vrot.slane %v1162, 5
        %v1165 = vsel %vm274, %v1160, %v1164
        %s1166 = scalar_lea.vmem %s1, 8
        %v1167 = vld [vmem:[%s1166] sm:$0x3]
        %v1168 = vunpack.c.l.b16 %v1155
        %v1169 = vunpack.c.l.b16 %v1165
        %v1170 = vpack.c.b16 %v1169, %v1168
        %v1172 = vsel %vm493, %v1170, 0
        %v1175 = vsel %vm518, %v1167, 0
        %1177 = vmatprep.subr.bf16.mxu0 0
        %1178 = vmatpush1.bf16.msra.mxu0 %v1175
        %1179 = vmatprep.subr.bf16.mxu0 0
        %1180 = vmatpush1.bf16.msra.mxu0 0
        %1181 = vmatprep.subr.bf16.mxu0 0
        %1182 = vmatpush1.bf16.msra.mxu0 0
        %1183 = vmatprep.subr.bf16.mxu0 0
        %1184 = vmatpush1.bf16.msra.mxu0 0
        %1185 = vmatprep.subr.bf16.mxu0 0
        %1186 = vmatpush1.bf16.msra.mxu0 0
        %1187 = vmatprep.subr.bf16.mxu0 0
        %1188 = vmatpush1.bf16.msra.mxu0 0
        %1189 = vmatprep.subr.bf16.mxu0 0
        %1190 = vmatpush1.bf16.msra.mxu0 0
        %1191 = vmatprep.subr.bf16.mxu0 0
        %1192 = vmatpush1.bf16.msra.mxu0 0
        %1193 = vmatprep.subr.bf16.mxu0 0
        %1194 = vmatpush1.bf16.msra.mxu0 0
        %1195 = vmatprep.subr.bf16.mxu0 0
        %1196 = vmatpush1.bf16.msra.mxu0 0
        %1197 = vmatprep.subr.bf16.mxu0 0
        %1198 = vmatpush1.bf16.msra.mxu0 0
        %1199 = vmatprep.subr.bf16.mxu0 0
        %1200 = vmatpush1.bf16.msra.mxu0 0
        %1201 = vmatprep.subr.bf16.mxu0 0
        %1202 = vmatpush1.bf16.msra.mxu0 0
        %1203 = vmatprep.subr.bf16.mxu0 0
        %1204 = vmatpush1.bf16.msra.mxu0 0
        %1205 = vmatprep.subr.bf16.mxu0 0
        %1206 = vmatpush1.bf16.msra.mxu0 0
        %1207 = vmatprep.subr.bf16.mxu0 0
        %1208 = vmatpush1.bf16.msra.mxu0 0
        %1209 = vmatprep.mubr.bf16.mxu0 0
        %1210 = vmatmul.mubr.bf16.gmra.mrb[0].mxu0 %v498
        %v1211 = vpop.f32.mrb[0].mxu0
        %v1212 = vadd.f32 0.0, %v1211
        %v1213 = vpop.f32.mrb[0].mxu0
        %v1214 = vpop.f32.mrb[0].mxu0
        %v1215 = vadd.f32 0.0, %v1214
        %v1216 = vpop.f32.mrb[0].mxu0
        %1217 = vmatprep.mubr.bf16.mxu0 0
        %1218 = vmatmul.mubr.bf16.gmra.mrb[0].mxu0 %v501
        %v1219 = vpop.f32.mrb[0].mxu0
        %v1220 = vadd.f32 0.0, %v1219
        %v1221 = vpop.f32.mrb[0].mxu0
        %v1222 = vpop.f32.mrb[0].mxu0
        %v1223 = vadd.f32 0.0, %v1222
        %v1224 = vpop.f32.mrb[0].mxu0
        %1225 = vmatprep.mubr.bf16.mxu0 0
        %1226 = vmatmul.mubr.bf16.gmra.mrb[0].mxu0 %v504
        %v1227 = vpop.f32.mrb[0].mxu0
        %v1228 = vadd.f32 0.0, %v1227
        %v1229 = vpop.f32.mrb[0].mxu0
        %v1230 = vpop.f32.mrb[0].mxu0
        %v1231 = vadd.f32 0.0, %v1230
        %v1232 = vpop.f32.mrb[0].mxu0
        %1233 = vmatprep.mubr.bf16.mxu0 0
        %1234 = vmatmul.mubr.bf16.gmra.mrb[0].mxu0 %v507
        %v1235 = vpop.f32.mrb[0].mxu0
        %v1236 = vadd.f32 0.0, %v1235
        %v1237 = vpop.f32.mrb[0].mxu0
        %v1238 = vpop.f32.mrb[0].mxu0
        %v1239 = vadd.f32 0.0, %v1238
        %v1240 = vpop.f32.mrb[0].mxu0
        %1241 = vmatprep.mubr.bf16.mxu0 0
        %1242 = vmatmul.mubr.bf16.gmra.mrb[0].mxu0 %v510
        %v1243 = vpop.f32.mrb[0].mxu0
        %v1244 = vadd.f32 0.0, %v1243
        %v1245 = vpop.f32.mrb[0].mxu0
        %v1246 = vpop.f32.mrb[0].mxu0
        %v1247 = vadd.f32 0.0, %v1246
        %v1248 = vpop.f32.mrb[0].mxu0
        %1249 = vmatprep.mubr.bf16.mxu0 0
        %1250 = vmatmul.mubr.bf16.gmra.mrb[0].mxu0 %v513
        %v1251 = vpop.f32.mrb[0].mxu0
        %v1252 = vadd.f32 0.0, %v1251
        %v1253 = vpop.f32.mrb[0].mxu0
        %v1254 = vpop.f32.mrb[0].mxu0
        %v1255 = vadd.f32 0.0, %v1254
        %v1256 = vpop.f32.mrb[0].mxu0
        %1257 = vmatprep.mubr.bf16.mxu0 0
        %1258 = vmatmul.mubr.bf16.gmra.mrb[0].mxu0 %v516
        %v1259 = vpop.f32.mrb[0].mxu0
        %v1260 = vadd.f32 0.0, %v1259
        %v1261 = vpop.f32.mrb[0].mxu0
        %v1262 = vpop.f32.mrb[0].mxu0
        %v1263 = vadd.f32 0.0, %v1262
        %v1264 = vpop.f32.mrb[0].mxu0
        %1265 = vmatprep.mubr.bf16.mxu0 0
        %1266 = vmatmul.mubr.bf16.gmra.mrb[0].mxu0 %v1172
        %v1267 = vpop.f32.mrb[0].mxu0
        %v1268 = vadd.f32 0.0, %v1267
        %v1269 = vpop.f32.mrb[0].mxu0
        %v1270 = vpop.f32.mrb[0].mxu0
        %v1271 = vadd.f32 0.0, %v1270
        %v1272 = vpop.f32.mrb[0].mxu0
        %1273 = vdwg.mxu0
        %v1274 = vadd.f32 %v1126, %v1212
        %v1275 = vadd.f32 %v1127, %v1215
        %v1276 = vadd.f32 %v1128, %v1220
        %v1277 = vadd.f32 %v1129, %v1223
        %v1278 = vadd.f32 %v1130, %v1228
        %v1279 = vadd.f32 %v1131, %v1231
        %v1280 = vadd.f32 %v1132, %v1236
        %v1281 = vadd.f32 %v1133, %v1239
        %v1282 = vadd.f32 %v1134, %v1244
        %v1283 = vadd.f32 %v1135, %v1247
        %v1284 = vadd.f32 %v1136, %v1252
        %v1285 = vadd.f32 %v1137, %v1255
        %v1286 = vadd.f32 %v1138, %v1260
        %v1287 = vadd.f32 %v1139, %v1263
        %v1288 = vadd.f32 %v1140, %v1268
        %v1289 = vadd.f32 %v1141, %v1271
        %v1291 = vrot.slane %v262, 5
        %v1292 = vrot.slane %v1291, 4
        %v1293 = vrot.slane %v263, 5
        %v1294 = vsel %vm793, %v1292, %v1293
        %v1295 = vrot.slane %v1293, 4
        %v1296 = vrot.slane %v264, 5
        %v1297 = vsel %vm793, %v1295, %v1296
        %s1298 = scalar_lea.vmem %s1, 10
        %v1299 = vld [vmem:[%s1298] sm:$0x3]
        %v1300 = vunpack.c.l.b16 %v1294
        %v1301 = vunpack.c.l.b16 %v1297
        %v1302 = vpack.c.b16 %v1301, %v1300
        %v1304 = vsel %vm493, %v1302, 0
        %v1307 = vsel %vm518, %v1299, 0
        %1309 = vmatprep.subr.bf16.mxu0 0
        %1310 = vmatpush1.bf16.msra.mxu0 %v1307
        %1311 = vmatprep.subr.bf16.mxu0 0
        %1312 = vmatpush1.bf16.msra.mxu0 0
        %1313 = vmatprep.subr.bf16.mxu0 0
        %1314 = vmatpush1.bf16.msra.mxu0 0
        %1315 = vmatprep.subr.bf16.mxu0 0
        %1316 = vmatpush1.bf16.msra.mxu0 0
        %1317 = vmatprep.subr.bf16.mxu0 0
        %1318 = vmatpush1.bf16.msra.mxu0 0
        %1319 = vmatprep.subr.bf16.mxu0 0
        %1320 = vmatpush1.bf16.msra.mxu0 0
        %1321 = vmatprep.subr.bf16.mxu0 0
        %1322 = vmatpush1.bf16.msra.mxu0 0
        %1323 = vmatprep.subr.bf16.mxu0 0
        %1324 = vmatpush1.bf16.msra.mxu0 0
        %1325 = vmatprep.subr.bf16.mxu0 0
        %1326 = vmatpush1.bf16.msra.mxu0 0
        %1327 = vmatprep.subr.bf16.mxu0 0
        %1328 = vmatpush1.bf16.msra.mxu0 0
        %1329 = vmatprep.subr.bf16.mxu0 0
        %1330 = vmatpush1.bf16.msra.mxu0 0
        %1331 = vmatprep.subr.bf16.mxu0 0
        %1332 = vmatpush1.bf16.msra.mxu0 0
        %1333 = vmatprep.subr.bf16.mxu0 0
        %1334 = vmatpush1.bf16.msra.mxu0 0
        %1335 = vmatprep.subr.bf16.mxu0 0
        %1336 = vmatpush1.bf16.msra.mxu0 0
        %1337 = vmatprep.subr.bf16.mxu0 0
        %1338 = vmatpush1.bf16.msra.mxu0 0
        %1339 = vmatprep.subr.bf16.mxu0 0
        %1340 = vmatpush1.bf16.msra.mxu0 0
        %1341 = vmatprep.mubr.bf16.mxu0 0
        %1342 = vmatmul.mubr.bf16.gmra.mrb[0].mxu0 %v880
        %v1343 = vpop.f32.mrb[0].mxu0
        %v1344 = vadd.f32 0.0, %v1343
        %v1345 = vpop.f32.mrb[0].mxu0
        %v1346 = vpop.f32.mrb[0].mxu0
        %v1347 = vadd.f32 0.0, %v1346
        %v1348 = vpop.f32.mrb[0].mxu0
        %1349 = vmatprep.mubr.bf16.mxu0 0
        %1350 = vmatmul.mubr.bf16.gmra.mrb[0].mxu0 %v883
        %v1351 = vpop.f32.mrb[0].mxu0
        %v1352 = vadd.f32 0.0, %v1351
        %v1353 = vpop.f32.mrb[0].mxu0
        %v1354 = vpop.f32.mrb[0].mxu0
        %v1355 = vadd.f32 0.0, %v1354
        %v1356 = vpop.f32.mrb[0].mxu0
        %1357 = vmatprep.mubr.bf16.mxu0 0
        %1358 = vmatmul.mubr.bf16.gmra.mrb[0].mxu0 %v886
        %v1359 = vpop.f32.mrb[0].mxu0
        %v1360 = vadd.f32 0.0, %v1359
        %v1361 = vpop.f32.mrb[0].mxu0
        %v1362 = vpop.f32.mrb[0].mxu0
        %v1363 = vadd.f32 0.0, %v1362
        %v1364 = vpop.f32.mrb[0].mxu0
        %1365 = vmatprep.mubr.bf16.mxu0 0
        %1366 = vmatmul.mubr.bf16.gmra.mrb[0].mxu0 %v889
        %v1367 = vpop.f32.mrb[0].mxu0
        %v1368 = vadd.f32 0.0, %v1367
        %v1369 = vpop.f32.mrb[0].mxu0
        %v1370 = vpop.f32.mrb[0].mxu0
        %v1371 = vadd.f32 0.0, %v1370
        %v1372 = vpop.f32.mrb[0].mxu0
        %1373 = vmatprep.mubr.bf16.mxu0 0
        %1374 = vmatmul.mubr.bf16.gmra.mrb[0].mxu0 %v892
        %v1375 = vpop.f32.mrb[0].mxu0
        %v1376 = vadd.f32 0.0, %v1375
        %v1377 = vpop.f32.mrb[0].mxu0
        %v1378 = vpop.f32.mrb[0].mxu0
        %v1379 = vadd.f32 0.0, %v1378
        %v1380 = vpop.f32.mrb[0].mxu0
        %1381 = vmatprep.mubr.bf16.mxu0 0
        %1382 = vmatmul.mubr.bf16.gmra.mrb[0].mxu0 %v895
        %v1383 = vpop.f32.mrb[0].mxu0
        %v1384 = vadd.f32 0.0, %v1383
        %v1385 = vpop.f32.mrb[0].mxu0
        %v1386 = vpop.f32.mrb[0].mxu0
        %v1387 = vadd.f32 0.0, %v1386
        %v1388 = vpop.f32.mrb[0].mxu0
        %1389 = vmatprep.mubr.bf16.mxu0 0
        %1390 = vmatmul.mubr.bf16.gmra.mrb[0].mxu0 %v898
        %v1391 = vpop.f32.mrb[0].mxu0
        %v1392 = vadd.f32 0.0, %v1391
        %v1393 = vpop.f32.mrb[0].mxu0
        %v1394 = vpop.f32.mrb[0].mxu0
        %v1395 = vadd.f32 0.0, %v1394
        %v1396 = vpop.f32.mrb[0].mxu0
        %1397 = vmatprep.mubr.bf16.mxu0 0
        %1398 = vmatmul.mubr.bf16.gmra.mrb[0].mxu0 %v1304
        %v1399 = vpop.f32.mrb[0].mxu0
        %v1400 = vadd.f32 0.0, %v1399
        %v1401 = vpop.f32.mrb[0].mxu0
        %v1402 = vpop.f32.mrb[0].mxu0
        %v1403 = vadd.f32 0.0, %v1402
        %v1404 = vpop.f32.mrb[0].mxu0
        %1405 = vdwg.mxu0
        %v1406 = vadd.f32 %v1274, %v1344
        %v1407 = vadd.f32 %v1275, %v1347
        %v1408 = vadd.f32 %v1276, %v1352
        %v1409 = vadd.f32 %v1277, %v1355
        %v1410 = vadd.f32 %v1278, %v1360
        %v1411 = vadd.f32 %v1279, %v1363
        %v1412 = vadd.f32 %v1280, %v1368
        %v1413 = vadd.f32 %v1281, %v1371
        %v1414 = vadd.f32 %v1282, %v1376
        %v1415 = vadd.f32 %v1283, %v1379
        %v1416 = vadd.f32 %v1284, %v1384
        %v1417 = vadd.f32 %v1285, %v1387
        %v1418 = vadd.f32 %v1286, %v1392
        %v1419 = vadd.f32 %v1287, %v1395
        %v1420 = vadd.f32 %v1288, %v1400
        %v1421 = vadd.f32 %v1289, %v1403
        %s1422 = scalar_lea.vmem %s1, 12
        %v1423 = vld [vmem:[%s1422] sm:$0x3]
        %v1426 = vunpack.c.l.b16 %v268
        %v1427 = vunpack.c.l.b16 %v269
        %v1428 = vpack.c.b16 %v1427, %v1426
        %v1430 = vsel %vm493, %v1428, 0
        %v1433 = vsel %vm518, %v1423, 0
        %1435 = vmatprep.subr.bf16.mxu0 0
        %1436 = vmatpush1.bf16.msra.mxu0 %v1433
        %1437 = vmatprep.subr.bf16.mxu0 0
        %1438 = vmatpush1.bf16.msra.mxu0 0
        %1439 = vmatprep.subr.bf16.mxu0 0
        %1440 = vmatpush1.bf16.msra.mxu0 0
        %1441 = vmatprep.subr.bf16.mxu0 0
        %1442 = vmatpush1.bf16.msra.mxu0 0
        %1443 = vmatprep.subr.bf16.mxu0 0
        %1444 = vmatpush1.bf16.msra.mxu0 0
        %1445 = vmatprep.subr.bf16.mxu0 0
        %1446 = vmatpush1.bf16.msra.mxu0 0
        %1447 = vmatprep.subr.bf16.mxu0 0
        %1448 = vmatpush1.bf16.msra.mxu0 0
        %1449 = vmatprep.subr.bf16.mxu0 0
        %1450 = vmatpush1.bf16.msra.mxu0 0
        %1451 = vmatprep.subr.bf16.mxu0 0
        %1452 = vmatpush1.bf16.msra.mxu0 0
        %1453 = vmatprep.subr.bf16.mxu0 0
        %1454 = vmatpush1.bf16.msra.mxu0 0
        %1455 = vmatprep.subr.bf16.mxu0 0
        %1456 = vmatpush1.bf16.msra.mxu0 0
        %1457 = vmatprep.subr.bf16.mxu0 0
        %1458 = vmatpush1.bf16.msra.mxu0 0
        %1459 = vmatprep.subr.bf16.mxu0 0
        %1460 = vmatpush1.bf16.msra.mxu0 0
        %1461 = vmatprep.subr.bf16.mxu0 0
        %1462 = vmatpush1.bf16.msra.mxu0 0
        %1463 = vmatprep.subr.bf16.mxu0 0
        %1464 = vmatpush1.bf16.msra.mxu0 0
        %1465 = vmatprep.subr.bf16.mxu0 0
        %1466 = vmatpush1.bf16.msra.mxu0 0
        %1467 = vmatprep.mubr.bf16.mxu0 0
        %1468 = vmatmul.mubr.bf16.gmra.mrb[0].mxu0 %v666
        %v1469 = vpop.f32.mrb[0].mxu0
        %v1470 = vadd.f32 0.0, %v1469
        %v1471 = vpop.f32.mrb[0].mxu0
        %v1472 = vpop.f32.mrb[0].mxu0
        %v1473 = vadd.f32 0.0, %v1472
        %v1474 = vpop.f32.mrb[0].mxu0
        %1475 = vmatprep.mubr.bf16.mxu0 0
        %1476 = vmatmul.mubr.bf16.gmra.mrb[0].mxu0 %v669
        %v1477 = vpop.f32.mrb[0].mxu0
        %v1478 = vadd.f32 0.0, %v1477
        %v1479 = vpop.f32.mrb[0].mxu0
        %v1480 = vpop.f32.mrb[0].mxu0
        %v1481 = vadd.f32 0.0, %v1480
        %v1482 = vpop.f32.mrb[0].mxu0
        %1483 = vmatprep.mubr.bf16.mxu0 0
        %1484 = vmatmul.mubr.bf16.gmra.mrb[0].mxu0 %v672
        %v1485 = vpop.f32.mrb[0].mxu0
        %v1486 = vadd.f32 0.0, %v1485
        %v1487 = vpop.f32.mrb[0].mxu0
        %v1488 = vpop.f32.mrb[0].mxu0
        %v1489 = vadd.f32 0.0, %v1488
        %v1490 = vpop.f32.mrb[0].mxu0
        %1491 = vmatprep.mubr.bf16.mxu0 0
        %1492 = vmatmul.mubr.bf16.gmra.mrb[0].mxu0 %v675
        %v1493 = vpop.f32.mrb[0].mxu0
        %v1494 = vadd.f32 0.0, %v1493
        %v1495 = vpop.f32.mrb[0].mxu0
        %v1496 = vpop.f32.mrb[0].mxu0
        %v1497 = vadd.f32 0.0, %v1496
        %v1498 = vpop.f32.mrb[0].mxu0
        %1499 = vmatprep.mubr.bf16.mxu0 0
        %1500 = vmatmul.mubr.bf16.gmra.mrb[0].mxu0 %v678
        %v1501 = vpop.f32.mrb[0].mxu0
        %v1502 = vadd.f32 0.0, %v1501
        %v1503 = vpop.f32.mrb[0].mxu0
        %v1504 = vpop.f32.mrb[0].mxu0
        %v1505 = vadd.f32 0.0, %v1504
        %v1506 = vpop.f32.mrb[0].mxu0
        %1507 = vmatprep.mubr.bf16.mxu0 0
        %1508 = vmatmul.mubr.bf16.gmra.mrb[0].mxu0 %v681
        %v1509 = vpop.f32.mrb[0].mxu0
        %v1510 = vadd.f32 0.0, %v1509
        %v1511 = vpop.f32.mrb[0].mxu0
        %v1512 = vpop.f32.mrb[0].mxu0
        %v1513 = vadd.f32 0.0, %v1512
        %v1514 = vpop.f32.mrb[0].mxu0
        %1515 = vmatprep.mubr.bf16.mxu0 0
        %1516 = vmatmul.mubr.bf16.gmra.mrb[0].mxu0 %v1024
        %v1517 = vpop.f32.mrb[0].mxu0
        %v1518 = vadd.f32 0.0, %v1517
        %v1519 = vpop.f32.mrb[0].mxu0
        %v1520 = vpop.f32.mrb[0].mxu0
        %v1521 = vadd.f32 0.0, %v1520
        %v1522 = vpop.f32.mrb[0].mxu0
        %1523 = vmatprep.mubr.bf16.mxu0 0
        %1524 = vmatmul.mubr.bf16.gmra.mrb[0].mxu0 %v1430
        %v1525 = vpop.f32.mrb[0].mxu0
        %v1526 = vadd.f32 0.0, %v1525
        %v1527 = vpop.f32.mrb[0].mxu0
        %v1528 = vpop.f32.mrb[0].mxu0
        %v1529 = vadd.f32 0.0, %v1528
        %v1530 = vpop.f32.mrb[0].mxu0
        %1531 = vdwg.mxu0
        %v1532 = vadd.f32 %v1406, %v1470
        %v1533 = vadd.f32 %v1407, %v1473
        %v1534 = vadd.f32 %v1408, %v1478
        %v1535 = vadd.f32 %v1409, %v1481
        %v1536 = vadd.f32 %v1410, %v1486
        %v1537 = vadd.f32 %v1411, %v1489
        %v1538 = vadd.f32 %v1412, %v1494
        %v1539 = vadd.f32 %v1413, %v1497
        %v1540 = vadd.f32 %v1414, %v1502
        %v1541 = vadd.f32 %v1415, %v1505
        %v1542 = vadd.f32 %v1416, %v1510
        %v1543 = vadd.f32 %v1417, %v1513
        %v1544 = vadd.f32 %v1418, %v1518
        %v1545 = vadd.f32 %v1419, %v1521
        %v1546 = vadd.f32 %v1420, %v1526
        %v1547 = vadd.f32 %v1421, %v1529
        %v1549 = vshrl.u32 %v268, 16
        %v1551 = vrot.slane %v1549, 4
        %v1552 = vshll.u32 %v268, 16
        %v1554 = vrot.slane %v1552, 5
        %v1555 = vor.u32 %v1551, %v1554
        %v1556 = vrot.slane %v1555, 4
        %v1558 = vshll.u32 %v269, 16
        %v1560 = vrot.slane %v1558, 5
        %v1561 = vsel %vm274, %v1556, %v1560
        %v1562 = vshrl.u32 %v269, 16
        %v1564 = vrot.slane %v1562, 4
        %v1565 = vor.u32 %v1564, %v1560
        %v1566 = vrot.slane %v1565, 4
        %v1568 = vshll.u32 %v270, 16
        %v1570 = vrot.slane %v1568, 5
        %v1571 = vsel %vm274, %v1566, %v1570
        %s1572 = scalar_lea.vmem %s1, 14
        %v1573 = vld [vmem:[%s1572] sm:$0x3]
        %v1574 = vunpack.c.l.b16 %v1561
        %v1575 = vunpack.c.l.b16 %v1571
        %v1576 = vpack.c.b16 %v1575, %v1574
        %v1578 = vsel %vm493, %v1576, 0
        %v1581 = vsel %vm518, %v1573, 0
        %1583 = vmatprep.subr.bf16.mxu0 0
        %1584 = vmatpush1.bf16.msra.mxu0 %v1581
        %1585 = vmatprep.subr.bf16.mxu0 0
        %1586 = vmatpush1.bf16.msra.mxu0 0
        %1587 = vmatprep.subr.bf16.mxu0 0
        %1588 = vmatpush1.bf16.msra.mxu0 0
        %1589 = vmatprep.subr.bf16.mxu0 0
        %1590 = vmatpush1.bf16.msra.mxu0 0
        %1591 = vmatprep.subr.bf16.mxu0 0
        %1592 = vmatpush1.bf16.msra.mxu0 0
        %1593 = vmatprep.subr.bf16.mxu0 0
        %1594 = vmatpush1.bf16.msra.mxu0 0
        %1595 = vmatprep.subr.bf16.mxu0 0
        %1596 = vmatpush1.bf16.msra.mxu0 0
        %1597 = vmatprep.subr.bf16.mxu0 0
        %1598 = vmatpush1.bf16.msra.mxu0 0
        %1599 = vmatprep.subr.bf16.mxu0 0
        %1600 = vmatpush1.bf16.msra.mxu0 0
        %1601 = vmatprep.subr.bf16.mxu0 0
        %1602 = vmatpush1.bf16.msra.mxu0 0
        %1603 = vmatprep.subr.bf16.mxu0 0
        %1604 = vmatpush1.bf16.msra.mxu0 0
        %1605 = vmatprep.subr.bf16.mxu0 0
        %1606 = vmatpush1.bf16.msra.mxu0 0
        %1607 = vmatprep.subr.bf16.mxu0 0
        %1608 = vmatpush1.bf16.msra.mxu0 0
        %1609 = vmatprep.subr.bf16.mxu0 0
        %1610 = vmatpush1.bf16.msra.mxu0 0
        %1611 = vmatprep.subr.bf16.mxu0 0
        %1612 = vmatpush1.bf16.msra.mxu0 0
        %1613 = vmatprep.subr.bf16.mxu0 0
        %1614 = vmatpush1.bf16.msra.mxu0 0
        %1615 = vmatprep.mubr.bf16.mxu0 0
        %1616 = vmatmul.mubr.bf16.gmra.mrb[0].mxu0 %v501
        %v1617 = vpop.f32.mrb[0].mxu0
        %v1618 = vadd.f32 0.0, %v1617
        %v1619 = vpop.f32.mrb[0].mxu0
        %v1620 = vpop.f32.mrb[0].mxu0
        %v1621 = vadd.f32 0.0, %v1620
        %v1622 = vpop.f32.mrb[0].mxu0
        %1623 = vmatprep.mubr.bf16.mxu0 0
        %1624 = vmatmul.mubr.bf16.gmra.mrb[0].mxu0 %v504
        %v1625 = vpop.f32.mrb[0].mxu0
        %v1626 = vadd.f32 0.0, %v1625
        %v1627 = vpop.f32.mrb[0].mxu0
        %v1628 = vpop.f32.mrb[0].mxu0
        %v1629 = vadd.f32 0.0, %v1628
        %v1630 = vpop.f32.mrb[0].mxu0
        %1631 = vmatprep.mubr.bf16.mxu0 0
        %1632 = vmatmul.mubr.bf16.gmra.mrb[0].mxu0 %v507
        %v1633 = vpop.f32.mrb[0].mxu0
        %v1634 = vadd.f32 0.0, %v1633
        %v1635 = vpop.f32.mrb[0].mxu0
        %v1636 = vpop.f32.mrb[0].mxu0
        %v1637 = vadd.f32 0.0, %v1636
        %v1638 = vpop.f32.mrb[0].mxu0
        %1639 = vmatprep.mubr.bf16.mxu0 0
        %1640 = vmatmul.mubr.bf16.gmra.mrb[0].mxu0 %v510
        %v1641 = vpop.f32.mrb[0].mxu0
        %v1642 = vadd.f32 0.0, %v1641
        %v1643 = vpop.f32.mrb[0].mxu0
        %v1644 = vpop.f32.mrb[0].mxu0
        %v1645 = vadd.f32 0.0, %v1644
        %v1646 = vpop.f32.mrb[0].mxu0
        %1647 = vmatprep.mubr.bf16.mxu0 0
        %1648 = vmatmul.mubr.bf16.gmra.mrb[0].mxu0 %v513
        %v1649 = vpop.f32.mrb[0].mxu0
        %v1650 = vadd.f32 0.0, %v1649
        %v1651 = vpop.f32.mrb[0].mxu0
        %v1652 = vpop.f32.mrb[0].mxu0
        %v1653 = vadd.f32 0.0, %v1652
        %v1654 = vpop.f32.mrb[0].mxu0
        %1655 = vmatprep.mubr.bf16.mxu0 0
        %1656 = vmatmul.mubr.bf16.gmra.mrb[0].mxu0 %v516
        %v1657 = vpop.f32.mrb[0].mxu0
        %v1658 = vadd.f32 0.0, %v1657
        %v1659 = vpop.f32.mrb[0].mxu0
        %v1660 = vpop.f32.mrb[0].mxu0
        %v1661 = vadd.f32 0.0, %v1660
        %v1662 = vpop.f32.mrb[0].mxu0
        %1663 = vmatprep.mubr.bf16.mxu0 0
        %1664 = vmatmul.mubr.bf16.gmra.mrb[0].mxu0 %v1172
        %v1665 = vpop.f32.mrb[0].mxu0
        %v1666 = vadd.f32 0.0, %v1665
        %v1667 = vpop.f32.mrb[0].mxu0
        %v1668 = vpop.f32.mrb[0].mxu0
        %v1669 = vadd.f32 0.0, %v1668
        %v1670 = vpop.f32.mrb[0].mxu0
        %1671 = vmatprep.mubr.bf16.mxu0 0
        %1672 = vmatmul.mubr.bf16.gmra.mrb[0].mxu0 %v1578
        %v1673 = vpop.f32.mrb[0].mxu0
        %v1674 = vadd.f32 0.0, %v1673
        %v1675 = vpop.f32.mrb[0].mxu0
        %v1676 = vpop.f32.mrb[0].mxu0
        %v1677 = vadd.f32 0.0, %v1676
        %v1678 = vpop.f32.mrb[0].mxu0
        %1679 = vdwg.mxu0
        %v1680 = vadd.f32 %v1532, %v1618
        %v1681 = vadd.f32 %v1533, %v1621
        %v1682 = vadd.f32 %v1534, %v1626
        %v1683 = vadd.f32 %v1535, %v1629
        %v1684 = vadd.f32 %v1536, %v1634
        %v1685 = vadd.f32 %v1537, %v1637
        %v1686 = vadd.f32 %v1538, %v1642
        %v1687 = vadd.f32 %v1539, %v1645
        %v1688 = vadd.f32 %v1540, %v1650
        %v1689 = vadd.f32 %v1541, %v1653
        %v1690 = vadd.f32 %v1542, %v1658
        %v1691 = vadd.f32 %v1543, %v1661
        %v1692 = vadd.f32 %v1544, %v1666
        %v1693 = vadd.f32 %v1545, %v1669
        %v1694 = vadd.f32 %v1546, %v1674
        %v1695 = vadd.f32 %v1547, %v1677
        %v1697 = vrot.slane %v268, 5
        %v1698 = vrot.slane %v1697, 4
        %v1699 = vrot.slane %v269, 5
        %v1700 = vsel %vm793, %v1698, %v1699
        %v1701 = vrot.slane %v1699, 4
        %v1702 = vrot.slane %v270, 5
        %v1703 = vsel %vm793, %v1701, %v1702
        %s1704 = scalar_lea.vmem %s1, 16
        %v1705 = vld [vmem:[%s1704] sm:$0x3]
        %v1706 = vunpack.c.l.b16 %v1700
        %v1707 = vunpack.c.l.b16 %v1703
        %v1708 = vpack.c.b16 %v1707, %v1706
        %v1710 = vsel %vm493, %v1708, 0
        %v1713 = vsel %vm518, %v1705, 0
        %1715 = vmatprep.subr.bf16.mxu0 0
        %1716 = vmatpush1.bf16.msra.mxu0 %v1713
        %1717 = vmatprep.subr.bf16.mxu0 0
        %1718 = vmatpush1.bf16.msra.mxu0 0
        %1719 = vmatprep.subr.bf16.mxu0 0
        %1720 = vmatpush1.bf16.msra.mxu0 0
        %1721 = vmatprep.subr.bf16.mxu0 0
        %1722 = vmatpush1.bf16.msra.mxu0 0
        %1723 = vmatprep.subr.bf16.mxu0 0
        %1724 = vmatpush1.bf16.msra.mxu0 0
        %1725 = vmatprep.subr.bf16.mxu0 0
        %1726 = vmatpush1.bf16.msra.mxu0 0
        %1727 = vmatprep.subr.bf16.mxu0 0
        %1728 = vmatpush1.bf16.msra.mxu0 0
        %1729 = vmatprep.subr.bf16.mxu0 0
        %1730 = vmatpush1.bf16.msra.mxu0 0
        %1731 = vmatprep.subr.bf16.mxu0 0
        %1732 = vmatpush1.bf16.msra.mxu0 0
        %1733 = vmatprep.subr.bf16.mxu0 0
        %1734 = vmatpush1.bf16.msra.mxu0 0
        %1735 = vmatprep.subr.bf16.mxu0 0
        %1736 = vmatpush1.bf16.msra.mxu0 0
        %1737 = vmatprep.subr.bf16.mxu0 0
        %1738 = vmatpush1.bf16.msra.mxu0 0
        %1739 = vmatprep.subr.bf16.mxu0 0
        %1740 = vmatpush1.bf16.msra.mxu0 0
        %1741 = vmatprep.subr.bf16.mxu0 0
        %1742 = vmatpush1.bf16.msra.mxu0 0
        %1743 = vmatprep.subr.bf16.mxu0 0
        %1744 = vmatpush1.bf16.msra.mxu0 0
        %1745 = vmatprep.subr.bf16.mxu0 0
        %1746 = vmatpush1.bf16.msra.mxu0 0
        %1747 = vmatprep.mubr.bf16.mxu0 0
        %1748 = vmatmul.mubr.bf16.gmra.mrb[0].mxu0 %v883
        %v1749 = vpop.f32.mrb[0].mxu0
        %v1750 = vadd.f32 0.0, %v1749
        %v1751 = vpop.f32.mrb[0].mxu0
        %v1752 = vpop.f32.mrb[0].mxu0
        %v1753 = vadd.f32 0.0, %v1752
        %v1754 = vpop.f32.mrb[0].mxu0
        %1755 = vmatprep.mubr.bf16.mxu0 0
        %1756 = vmatmul.mubr.bf16.gmra.mrb[0].mxu0 %v886
        %v1757 = vpop.f32.mrb[0].mxu0
        %v1758 = vadd.f32 0.0, %v1757
        %v1759 = vpop.f32.mrb[0].mxu0
        %v1760 = vpop.f32.mrb[0].mxu0
        %v1761 = vadd.f32 0.0, %v1760
        %v1762 = vpop.f32.mrb[0].mxu0
        %1763 = vmatprep.mubr.bf16.mxu0 0
        %1764 = vmatmul.mubr.bf16.gmra.mrb[0].mxu0 %v889
        %v1765 = vpop.f32.mrb[0].mxu0
        %v1766 = vadd.f32 0.0, %v1765
        %v1767 = vpop.f32.mrb[0].mxu0
        %v1768 = vpop.f32.mrb[0].mxu0
        %v1769 = vadd.f32 0.0, %v1768
        %v1770 = vpop.f32.mrb[0].mxu0
        %1771 = vmatprep.mubr.bf16.mxu0 0
        %1772 = vmatmul.mubr.bf16.gmra.mrb[0].mxu0 %v892
        %v1773 = vpop.f32.mrb[0].mxu0
        %v1774 = vadd.f32 0.0, %v1773
        %v1775 = vpop.f32.mrb[0].mxu0
        %v1776 = vpop.f32.mrb[0].mxu0
        %v1777 = vadd.f32 0.0, %v1776
        %v1778 = vpop.f32.mrb[0].mxu0
        %1779 = vmatprep.mubr.bf16.mxu0 0
        %1780 = vmatmul.mubr.bf16.gmra.mrb[0].mxu0 %v895
        %v1781 = vpop.f32.mrb[0].mxu0
        %v1782 = vadd.f32 0.0, %v1781
        %v1783 = vpop.f32.mrb[0].mxu0
        %v1784 = vpop.f32.mrb[0].mxu0
        %v1785 = vadd.f32 0.0, %v1784
        %v1786 = vpop.f32.mrb[0].mxu0
        %1787 = vmatprep.mubr.bf16.mxu0 0
        %1788 = vmatmul.mubr.bf16.gmra.mrb[0].mxu0 %v898
        %v1789 = vpop.f32.mrb[0].mxu0
        %v1790 = vadd.f32 0.0, %v1789
        %v1791 = vpop.f32.mrb[0].mxu0
        %v1792 = vpop.f32.mrb[0].mxu0
        %v1793 = vadd.f32 0.0, %v1792
        %v1794 = vpop.f32.mrb[0].mxu0
        %1795 = vmatprep.mubr.bf16.mxu0 0
        %1796 = vmatmul.mubr.bf16.gmra.mrb[0].mxu0 %v1304
        %v1797 = vpop.f32.mrb[0].mxu0
        %v1798 = vadd.f32 0.0, %v1797
        %v1799 = vpop.f32.mrb[0].mxu0
        %v1800 = vpop.f32.mrb[0].mxu0
        %v1801 = vadd.f32 0.0, %v1800
        %v1802 = vpop.f32.mrb[0].mxu0
        %1803 = vmatprep.mubr.bf16.mxu0 0
        %1804 = vmatmul.mubr.bf16.gmra.mrb[0].mxu0 %v1710
        %v1805 = vpop.f32.mrb[0].mxu0
        %v1806 = vadd.f32 0.0, %v1805
        %v1807 = vpop.f32.mrb[0].mxu0
        %v1808 = vpop.f32.mrb[0].mxu0
        %v1809 = vadd.f32 0.0, %v1808
        %v1810 = vpop.f32.mrb[0].mxu0
        %1811 = vdwg.mxu0
        %v1812 = vadd.f32 %v1680, %v1750
        %v1813 = vadd.f32 %v1681, %v1753
        %v1814 = vadd.f32 %v1682, %v1758
        %v1815 = vadd.f32 %v1683, %v1761
        %v1816 = vadd.f32 %v1684, %v1766
        %v1817 = vadd.f32 %v1685, %v1769
        %v1818 = vadd.f32 %v1686, %v1774
        %v1819 = vadd.f32 %v1687, %v1777
        %v1820 = vadd.f32 %v1688, %v1782
        %v1821 = vadd.f32 %v1689, %v1785
        %v1822 = vadd.f32 %v1690, %v1790
        %v1823 = vadd.f32 %v1691, %v1793
        %v1824 = vadd.f32 %v1692, %v1798
        %v1825 = vadd.f32 %v1693, %v1801
        %v1826 = vadd.f32 %v1694, %v1806
        %v1827 = vadd.f32 %v1695, %v1809
        %v1828 = vld [vmem:[%s2] sm:$0x1]
        %v1830 = vlaneseq
        %v1831 = vshrl.u32 %v1830, 7
        %v1832 = vsub.s32 0, %v1831
        %v1833 = vrot.slane %v1828, %v1832
        %v1835 = vadd.f32 %v1812, %v1833
        %v1836 = vadd.f32 %v1813, %v1833
        %v1837 = vadd.f32 %v1814, %v1833
        %v1838 = vadd.f32 %v1815, %v1833
        %v1839 = vadd.f32 %v1816, %v1833
        %v1840 = vadd.f32 %v1817, %v1833
        %v1841 = vadd.f32 %v1818, %v1833
        %v1842 = vadd.f32 %v1819, %v1833
        %v1843 = vadd.f32 %v1820, %v1833
        %v1844 = vadd.f32 %v1821, %v1833
        %v1845 = vadd.f32 %v1822, %v1833
        %v1846 = vadd.f32 %v1823, %v1833
        %v1847 = vadd.f32 %v1824, %v1833
        %v1848 = vadd.f32 %v1825, %v1833
        %v1849 = vadd.f32 %v1826, %v1833
        %v1850 = vadd.f32 %v1827, %v1833
        %v1851 = vadd.f32 %v1835, %v1836
        %v1852 = vadd.f32 %v1851, %v1837
        %v1853 = vadd.f32 %v1852, %v1838
        %v1854 = vadd.f32 %v1853, %v1839
        %v1855 = vadd.f32 %v1854, %v1840
        %v1856 = vadd.f32 %v1855, %v1841
        %v1857 = vadd.f32 %v1856, %v1842
        %v1858 = vadd.f32 %v1857, %v1843
        %v1859 = vadd.f32 %v1858, %v1844
        %v1860 = vadd.f32 %v1859, %v1845
        %v1861 = vadd.f32 %v1860, %v1846
        %v1862 = vadd.f32 %v1861, %v1847
        %v1863 = vadd.f32 %v1862, %v1848
        %v1864 = vadd.f32 %v1863, %v1849
        %v1865 = vadd.f32 %v1864, %v1850
        %v1866 = vrot.slane %v1865, 4
        %v1867 = vadd.f32 %v1865, %v1866
        %v1868 = vrot.slane %v1867, 2
        %v1869 = vadd.f32 %v1867, %v1868
        %v1870 = vrot.slane %v1869, 1
        %v1871 = vadd.f32 %v1869, %v1870
        %1872 = vst [vmem:[%s217] sm:$0x1] %v1871
        %v1873 = vmul.f32 %v1835, %v1835
        %v1874 = vmul.f32 %v1836, %v1836
        %v1875 = vmul.f32 %v1837, %v1837
        %v1876 = vmul.f32 %v1838, %v1838
        %v1877 = vmul.f32 %v1839, %v1839
        %v1878 = vmul.f32 %v1840, %v1840
        %v1879 = vmul.f32 %v1841, %v1841
        %v1880 = vmul.f32 %v1842, %v1842
        %v1881 = vmul.f32 %v1843, %v1843
        %v1882 = vmul.f32 %v1844, %v1844
        %v1883 = vmul.f32 %v1845, %v1845
        %v1884 = vmul.f32 %v1846, %v1846
        %v1885 = vmul.f32 %v1847, %v1847
        %v1886 = vmul.f32 %v1848, %v1848
        %v1887 = vmul.f32 %v1849, %v1849
        %v1888 = vmul.f32 %v1850, %v1850
        %v1889 = vadd.f32 %v1873, %v1874
        %v1890 = vadd.f32 %v1889, %v1875
        %v1891 = vadd.f32 %v1890, %v1876
        %v1892 = vadd.f32 %v1891, %v1877
        %v1893 = vadd.f32 %v1892, %v1878
        %v1894 = vadd.f32 %v1893, %v1879
        %v1895 = vadd.f32 %v1894, %v1880
        %v1896 = vadd.f32 %v1895, %v1881
        %v1897 = vadd.f32 %v1896, %v1882
        %v1898 = vadd.f32 %v1897, %v1883
        %v1899 = vadd.f32 %v1898, %v1884
        %v1900 = vadd.f32 %v1899, %v1885
        %v1901 = vadd.f32 %v1900, %v1886
        %v1902 = vadd.f32 %v1901, %v1887
        %v1903 = vadd.f32 %v1902, %v1888
        %v1904 = vrot.slane %v1903, 4
        %v1905 = vadd.f32 %v1903, %v1904
        %v1906 = vrot.slane %v1905, 2
        %v1907 = vadd.f32 %v1905, %v1906
        %v1908 = vrot.slane %v1907, 1
        %v1909 = vadd.f32 %v1907, %v1908
        %1910 = vst [vmem:[%s217 + $0x1] sm:$0x1] %v1909
        %1911 = vst [vmem:[%s210] sm:$0xff] %v1835
        %1912 = vst [vmem:[%s210 + $0x8] sm:$0xff] %v1836
        %1913 = vst [vmem:[%s210 + $0x10] sm:$0xff] %v1837
        %1914 = vst [vmem:[%s210 + $0x18] sm:$0xff] %v1838
        %1915 = vst [vmem:[%s210 + $0x20] sm:$0xff] %v1839
        %1916 = vst [vmem:[%s210 + $0x28] sm:$0xff] %v1840
        %1917 = vst [vmem:[%s210 + $0x30] sm:$0xff] %v1841
        %1918 = vst [vmem:[%s210 + $0x38] sm:$0xff] %v1842
        %1919 = vst [vmem:[%s210 + $0x40] sm:$0xff] %v1843
        %1920 = vst [vmem:[%s210 + $0x48] sm:$0xff] %v1844
        %1921 = vst [vmem:[%s210 + $0x50] sm:$0xff] %v1845
        %1922 = vst [vmem:[%s210 + $0x58] sm:$0xff] %v1846
        %1923 = vst [vmem:[%s210 + $0x60] sm:$0xff] %v1847
        %1924 = vst [vmem:[%s210 + $0x68] sm:$0xff] %v1848
        %1925 = vst [vmem:[%s210 + $0x70] sm:$0xff] %v1849
        %1926 = vst [vmem:[%s210 + $0x78] sm:$0xff] %v1850
        %s1927 = sand.u32 %s112, 1
        %s1928 = scalar_lea.sflag [#allocation3], %s1927
        %s1929 = sand.u32 %s112, 1
        %s1930 = smul.addr %s1929, 128
        %s1931 = scalar_lea.vmem [#allocation2], %s1930
        %s1932 = sand.u32 %s140, 1
        %s1933 = scalar_lea.sflag [#allocation5], %s1932
        %s1934 = sand.u32 %s140, 1
        %s1935 = smul.addr %s1934, 2
        %s1936 = scalar_lea.vmem [#allocation4], %s1935
        // Predicated region
        $region33: #{tpu_custom_call.1} parent=31 // pred_check
          %p1937 = pneg %p122
        $region34: #{tpu_custom_call.1} parent=31 // pred_check_branch
          %1939 = sbr.rel (%p1937) target = $region36
        $region35: #{tpu_custom_call.1} parent=31 // pred_region
          %s1940 = smul.u32 8, %s27
          %s1942 = ssub.s32 2048, 2048
          %1943 = vsyncadd %s1928, %s1942
          %s1944 = smul.addr %s1940, 2
          %s1945 = smul.addr %s26, 32
          %s1946 = sadd.s32 %s1944, %s1945
          %s1947 = smul.addr %s1946, 128
          %s1948 = scalar_lea.hbm %s3, %s1947
          %s1949 = sshll.u32 %s1931, 4
          %s1950 = int_to_ptr.vmem [resolvable:$true] %s1949
          %1955 = dma.vmem_to_hbm [thread:$0]  %s1950, 2048, %s1948, %s1928, 128, 128, 8
        $region36: #{tpu_custom_call.1} parent=31 // pred_fallthru
          _
        // Predicated region
        $region37: #{tpu_custom_call.1} parent=31 // pred_check
          %p1956 = pneg %p150
        $region38: #{tpu_custom_call.1} parent=31 // pred_check_branch
          %1958 = sbr.rel (%p1956) target = $region40
        $region39: #{tpu_custom_call.1} parent=31 // pred_region
          %s1960 = ssub.s32 32, 32
          %1961 = vsyncadd %s1933, %s1960
          %s1962 = smul.addr %s26, 2
          %s1963 = sadd.s32 %s27, %s1962
          %s1964 = smul.addr %s1963, 32
          %s1965 = scalar_lea.hbm %s4, %s1964
          %s1967 = sshll.u32 %s1936, 4
          %s1968 = int_to_ptr.vmem [resolvable:$true] %s1967
          %1970 = dma.vmem_to_hbm [thread:$0]  %s1968, 32, %s1965, %s1933
        $region40: #{tpu_custom_call.1} parent=31 // pred_fallthru
          _
      $region32: #{tpu_custom_call.1} parent=5 // pred_fallthru
        _
      %p1971 = scmp.le.s32.totalorder 2, %s17
      // Predicated region
      $region41: #{tpu_custom_call.1} parent=5 // pred_check
        %p1972 = pneg %p1971
      $region42: #{tpu_custom_call.1} parent=5 // pred_check_branch
        %1974 = sbr.rel (%p1972) target = $region44
      $region43: #{tpu_custom_call.1} parent=5 // pred_region
        %s1975 = ssub.s32 %s17, 2
        // Predicated region
        $region45: #{tpu_custom_call.1} parent=43 // pred_check
          %p1976 = pneg %p128
        $region46: #{tpu_custom_call.1} parent=43 // pred_check_branch
          %1978 = sbr.rel (%p1976) target = $region48
        $region47: #{tpu_custom_call.1} parent=43 // pred_region
          %s1979 = sand.u32 %s113, 1
          %s1980 = scalar_lea.sflag [#allocation3], %s1979
          %s1981 = sand.u32 %s113, 1
          %s1982 = smul.addr %s1981, 128
          %s1983 = scalar_lea.vmem [#allocation2], %s1982
          %1984 = dma.done %s1980, 2048
        $region48: #{tpu_custom_call.1} parent=43 // pred_fallthru
          _
        // Predicated region
        $region49: #{tpu_custom_call.1} parent=43 // pred_check
          %p1985 = pneg %p156
        $region50: #{tpu_custom_call.1} parent=43 // pred_check_branch
          %1987 = sbr.rel (%p1985) target = $region52
        $region51: #{tpu_custom_call.1} parent=43 // pred_region
          %s1988 = sand.u32 %s141, 1
          %s1989 = scalar_lea.sflag [#allocation5], %s1988
          %s1990 = sand.u32 %s141, 1
          %s1991 = smul.addr %s1990, 2
          %s1992 = scalar_lea.vmem [#allocation4], %s1991
          %1993 = dma.done %s1989, 32
        $region52: #{tpu_custom_call.1} parent=43 // pred_fallthru
          _
      $region44: #{tpu_custom_call.1} parent=5 // pred_fallthru
        _
    $region6: #{tpu_custom_call.1} parent=1 // loop_footer
      %s21 = sadd.s32 1, %s17
    $region7: #{tpu_custom_call.1} parent=1 // loop_footer_branch
      %16 = sbr.rel target = $region3
    $region8: #{tpu_custom_call.1} parent=1 // loop_exit
      _
    %1994 = vsyncpa [#allocation3], 1
    %s1995 = scalar_lea.sflag [#allocation3], 1
    %1996 = vsyncpa %s1995, 1
    %1997 = vsyncpa [#allocation5], 1
    %s1998 = scalar_lea.sflag [#allocation5], 1
    %1999 = vsyncpa %s1998, 1

</llo_original>
